<compile_context>
chip_gen: v5e
topology: v5e:2x2
jax: 0.10.0
libtpu: 0.0.40
codegen_flags: <defaults>
</compile_context>

<pallas_src>
import jax
import jax.numpy as jnp
from jax.experimental import pallas as pl
from jax.experimental.pallas import tpu as pltpu

LANE = 128


def _round_up(x, m):
    return ((x + m - 1) // m) * m


def _vmem_spec():
    return pl.BlockSpec(memory_space=pltpu.MemorySpace.VMEM)


# ---------------------------------------------------------------------------
# Pallas kernels
# ---------------------------------------------------------------------------
def conv_pool_kernel(p_ref, w_ref, shift_ref, o_ref):
    """Fused conv + folded-BN + 2x2 maxpool + ReLU, quadrants lane-concatenated.

    p_ref:     (K, 4*Qpad) bf16  im2col patches; quadrant-major 128-aligned slabs
    w_ref:     (Cout, K)   bf16  conv weights with BN scale already folded in
    shift_ref: (Cout, 1)   f32   folded BN shift = beta + (bias - mean) * scale
    o_ref:     (Cout, Qpad) bf16 pooled activations, spatial axis in lanes
    """
    qp = o_ref.shape[1]
    y = jnp.dot(w_ref[...], p_ref[...], preferred_element_type=jnp.float32)
    # 2x2 maxpool == elementwise max over the four lane-aligned quadrant slabs.
    y = jnp.maximum(jnp.maximum(y[:, 0 * qp:1 * qp], y[:, 1 * qp:2 * qp]),
                    jnp.maximum(y[:, 2 * qp:3 * qp], y[:, 3 * qp:4 * qp]))
    # Adding the per-channel shift after the max is exact (constant per row);
    # relu(max(.)) == maxpool(relu(.)) by monotonicity.
    y = jnp.maximum(y + shift_ref[...], 0.0)
    o_ref[...] = y.astype(o_ref.dtype)


def conv2_fc_kernel(p_ref, w2_ref, sh2_ref, e_ref, w0_ref, b0_ref,
                    w1_ref, b1_ref, w2fc_ref, b2_ref, o_ref):
    """Fused layer2 (conv+BN+ReLU+pool) + torch flatten + FC stack, transposed.

    p_ref:    (150, 4*Qpad)   bf16  layer-2 im2col patches (quadrant slabs;
                                    within-slab column order = s*batch + n)
    w2_ref:   (16, 150)       bf16  BN-scale-folded conv2 weights
    sh2_ref:  (16, 1)         f32   folded BN shift
    e_ref:    (Qpad, 25*128)  bf16  0/1 expander: lane s*batch+n -> slab s, lane n
    w0_ref:   (120, 400)      bf16  fc weight, columns permuted to (s,c)-major
    b0_ref:   (120, 1)        f32
    w1_ref:   (84, 120)       bf16  fc1 weight (torch (out,in) layout as-is)
    b1_ref:   (84, 1)         f32
    w2fc_ref: (3, 84)         bf16  fc2 weight
    b2_ref:   (3, 1)          f32
    o_ref:    (3, 128)        f32   logits, transposed (samples in lanes 0..N-1)
    """
    qp = e_ref.shape[0]            # per-quadrant lane slab of the conv GEMM
    out_lanes = o_ref.shape[1]     # lane width carried through the FC stack
    n_pos = e_ref.shape[1] // out_lanes   # 25 pooled spatial positions

    # ---- conv2 + pool + BN shift + relu (single GEMM, slab max) ----
    y = jnp.dot(w2_ref[...], p_ref[...], preferred_element_type=jnp.float32)
    y = jnp.maximum(jnp.maximum(y[:, 0 * qp:1 * qp], y[:, 1 * qp:2 * qp]),
                    jnp.maximum(y[:, 2 * qp:3 * qp], y[:, 3 * qp:4 * qp]))
    y = jnp.maximum(y + sh2_ref[...], 0.0)                      # (16, qp) f32

    # ---- torch NCHW flatten, done with aligned ops only ----
    # Expander matmul (exact 0/1 gather): lane s*batch+n -> slab s, lane n.
    # Garbage lanes (column padding) are zeroed here because E only selects
    # real columns.
    yexp = jnp.dot(y.astype(jnp.bfloat16), e_ref[...],
                   preferred_element_type=jnp.float32)
    yexp = yexp.astype(jnp.bfloat16)                             # (16, 25*128)
    # Stack the 25 (16, 128) position-slabs along sublanes -> (400, 128);
    # row order (s*16 + c) matches the column permutation baked into w0_ref.
    flat_t = jnp.concatenate(
        [yexp[:, s * out_lanes:(s + 1) * out_lanes] for s in range(n_pos)],
        axis=0)

    # ---- FC stack (transposed: features on sublanes, samples on lanes) ----
    h = jnp.dot(w0_ref[...], flat_t, preferred_element_type=jnp.float32)
    h = jnp.maximum(h + b0_ref[...], 0.0)                        # (120, 128)
    h = jnp.dot(w1_ref[...], h.astype(jnp.bfloat16),
                preferred_element_type=jnp.float32)
    h = jnp.maximum(h + b1_ref[...], 0.0)                        # (84, 128)
    o = jnp.dot(w2fc_ref[...], h.astype(jnp.bfloat16),
                preferred_element_type=jnp.float32) + b2_ref[...]
    o_ref[...] = o.astype(o_ref.dtype)                           # (3, 128)


def conv1_block(patches, w, shift, q_pad):
    cout = w.shape[0]
    return pl.pallas_call(
        conv_pool_kernel,
        out_shape=jax.ShapeDtypeStruct((cout, q_pad), jnp.bfloat16),
        in_specs=[_vmem_spec()] * 3,
        out_specs=_vmem_spec(),
    )(patches, w, shift)


def conv2_fc_block(patches2, p):
    return pl.pallas_call(
        conv2_fc_kernel,
        out_shape=jax.ShapeDtypeStruct((p["w2l"].shape[0], LANE), jnp.float32),
        in_specs=[_vmem_spec()] * 10,
        out_specs=_vmem_spec(),
    )(patches2, p["w2f"], p["sh2"], p["E"], p["w0t"], p["b0"],
      p["w1l"], p["b1"], p["w2l"], p["b2"])


# ---------------------------------------------------------------------------
# Host-side glue (plain JAX): quadrant-packed im2col, parameter preparation
# ---------------------------------------------------------------------------
def im2col_pool_quadrants_concat(x_nhwc, k, pad, *, sample_major,
                                 lane_multiple=LANE, dtype=jnp.bfloat16):
    """(N,H,W,C) -> (k*k*C, 4*Qpad) patches, 2x2-pool quadrants lane-concatenated.

    The lane axis is [quadrant-major 128-aligned slabs]; within a slab the
    column order is n*Hp*Wp + u*Wp + v (sample_major=True) or
    (u*Wp + v)*N + n (sample_major=False).  Rows are ordered (di, dj, ci) to
    match the (Cout, kh*kw*Cin) weight matrices.  Padding lanes are zero.
    """
    n, h, w, c = x_nhwc.shape
    xp = jnp.pad(x_nhwc, ((0, 0), (pad, pad), (pad, pad), (0, 0)))
    ho = h + 2 * pad - k + 1
    wo = w + 2 * pad - k + 1
    hp, wp = ho // 2, wo // 2
    cols = [xp[:, di:di + ho, dj:dj + wo, :]
            for di in range(k) for dj in range(k)]
    p = jnp.stack(cols, axis=3)                       # (N, Ho, Wo, k*k, C)
    p = p.reshape(n, hp, 2, wp, 2, k * k, c)          # i -> (u, pi), j -> (v, pj)
    if sample_major:
        p = jnp.transpose(p, (2, 4, 5, 6, 0, 1, 3))   # (pi,pj,kk,C,N,Hp,Wp)
    else:
        p = jnp.transpose(p, (2, 4, 5, 6, 1, 3, 0))   # (pi,pj,kk,C,Hp,Wp,N)
    kdim = k * k * c
    q = n * hp * wp
    p = p.reshape(4, kdim, q)
    q_pad = _round_up(q, lane_multiple)
    if q_pad > q:
        p = jnp.pad(p, ((0, 0), (0, 0), (0, q_pad - q)))
    p = jnp.transpose(p, (1, 0, 2)).reshape(kdim, 4 * q_pad)
    return p.astype(dtype), (n, hp, wp, q_pad)


def _uniform(key, shape, fan_in):
    bound = 1.0 / jnp.sqrt(jnp.float32(fan_in))
    return jax.random.uniform(key, shape, jnp.float32, -bound, bound)


def init_raw_params(key):
    """Parameters in PyTorch layouts (Conv2d (Cout,Cin,kh,kw), Linear (out,in))."""
    ks = jax.random.split(key, 16)
    p = {}
    # layer1: Conv2d(1, 6, k=5, pad=2) + BatchNorm2d(6)
    p["w1"] = _uniform(ks[0], (6, 1, 5, 5), 25)
    p["b1"] = _uniform(ks[1], (6,), 25)
    p["g1"] = 1.0 + 0.1 * jax.random.normal(ks[2], (6,), jnp.float32)
    p["be1"] = 0.1 * jax.random.normal(ks[3], (6,), jnp.float32)
    p["rm1"] = jnp.zeros((6,), jnp.float32)
    p["rv1"] = jnp.ones((6,), jnp.float32)
    # layer2: Conv2d(6, 16, k=5, pad=0) + BatchNorm2d(16)
    p["w2"] = _uniform(ks[4], (16, 6, 5, 5), 150)
    p["b2"] = _uniform(ks[5], (16,), 150)
    p["g2"] = 1.0 + 0.1 * jax.random.normal(ks[6], (16,), jnp.float32)
    p["be2"] = 0.1 * jax.random.normal(ks[7], (16,), jnp.float32)
    p["rm2"] = jnp.zeros((16,), jnp.float32)
    p["rv2"] = jnp.ones((16,), jnp.float32)
    # fc: 400->120, fc1: 120->84, fc2: 84->3
    p["fw"] = _uniform(ks[8], (120, 400), 400)
    p["fb"] = _uniform(ks[9], (120,), 400)
    p["f1w"] = _uniform(ks[10], (84, 120), 120)
    p["f1b"] = _uniform(ks[11], (84,), 120)
    p["f2w"] = _uniform(ks[12], (3, 84), 84)
    p["f2b"] = _uniform(ks[13], (3,), 84)
    return p


def _conv_weight_to_matrix(w_oihw):
    """(Cout,Cin,kh,kw) torch layout -> (Cout, kh*kw*Cin); columns = (di,dj,ci)."""
    cout = w_oihw.shape[0]
    return jnp.transpose(w_oihw, (0, 2, 3, 1)).reshape(cout, -1)


def prepare_params(raw, batch, eps=1e-5):
    """One-time weight re-layout + BN fold (kept out of the jitted forward)."""
    assert batch <= LANE, "transposed FC stack carries samples on 128 lanes"
    p = {}
    # Inference BN fold: scale into the weight rows (exact), shift kept aside.
    s1 = raw["g1"] / jnp.sqrt(raw["rv1"] + eps)
    p["w1f"] = (_conv_weight_to_matrix(raw["w1"]) * s1[:, None]).astype(jnp.bfloat16)
    p["sh1"] = ((raw["be1"] + (raw["b1"] - raw["rm1"]) * s1)[:, None]
                ).astype(jnp.float32)
    s2 = raw["g2"] / jnp.sqrt(raw["rv2"] + eps)
    p["w2f"] = (_conv_weight_to_matrix(raw["w2"]) * s2[:, None]).astype(jnp.bfloat16)
    p["sh2"] = ((raw["be2"] + (raw["b2"] - raw["rm2"]) * s2)[:, None]
                ).astype(jnp.float32)
    # First FC weight: (out, in=c*25+s) -> columns permuted to (s*16+c) order so
    # the in-kernel row-concat of position slabs realizes torch's NCHW flatten.
    w0 = raw["fw"].reshape(120, 16, 25)
    p["w0t"] = jnp.transpose(w0, (0, 2, 1)).reshape(120, 400).astype(jnp.bfloat16)
    p["b0"] = raw["fb"][:, None].astype(jnp.float32)
    p["w1l"] = raw["f1w"].astype(jnp.bfloat16)                    # (84, 120)
    p["b1"] = raw["f1b"][:, None].astype(jnp.float32)
    p["w2l"] = raw["f2w"].astype(jnp.bfloat16)                    # (3, 84)
    p["b2"] = raw["f2b"][:, None].astype(jnp.float32)
    # 0/1 expander: conv2 output lane (s*batch + n) -> slab s, lane n; padding
    # lanes (n >= batch) map to zero so garbage never reaches the FC stack.
    qpad2 = _round_up(batch * 25, LANE)
    m = jnp.arange(qpad2)[:, None]
    j = jnp.arange(25 * LANE)[None, :]
    s_idx = j // LANE
    n_idx = j % LANE
    p["E"] = ((m == s_idx * batch + n_idx) & (n_idx < batch)).astype(jnp.bfloat16)
    return p


# ---------------------------------------------------------------------------
# Forward pass
# ---------------------------------------------------------------------------
def lenet_forward(x_nchw, p):
    x = jnp.transpose(x_nchw, (0, 2, 3, 1)).astype(jnp.float32)   # NCHW -> NHWC
    n = x.shape[0]

    # ---- layer1: conv(1->6, k5, pad2) + BN + ReLU + maxpool 2x2 ----
    pq1, (_, hp1, wp1, qpad1) = im2col_pool_quadrants_concat(
        x, k=5, pad=2, sample_major=True)                         # (25, 2048) bf16
    y1 = conv1_block(pq1, p["w1f"], p["sh1"], qpad1)              # (6, 512) bf16
    q1 = n * hp1 * wp1
    # Slice off padded (garbage) lanes before reusing y1 downstream.
    y1 = jnp.transpose(y1[:, :q1].reshape(6, n, hp1, wp1),
                       (1, 2, 3, 0))                              # (N, 14, 14, 6)

    # ---- layer2 + flatten + FC stack, all fused in one kernel ----
    pq2, _ = im2col_pool_quadrants_concat(
        y1, k=5, pad=0, sample_major=False)                       # (150, 512) bf16
    out_t = conv2_fc_block(pq2, p)                                # (3, 128) f32
    return jnp.transpose(out_t[:, :n])                            # (N, 3)


if __name__ == "__main__":
    key = jax.random.PRNGKey(0)
    k_x, k_p = jax.random.split(key)
    # LeNet's fc layer (400 = 16*5*5) implies 1x28x28 inputs (MNIST-like).
    x = jax.random.normal(k_x, (2, 1, 28, 28), jnp.float32)       # NCHW like torch
    params = prepare_params(init_raw_params(k_p), batch=x.shape[0])

    out = jax.jit(lenet_forward)(x, params)
    out = jax.block_until_ready(out)
    assert out.shape == (2, 3) and out.dtype == jnp.float32
    print("KERNEL_OK")
</pallas_src>

<mosaic_0001>
module attributes {stable_mosaic.version = 11 : i64} {
  func.func @conv_pool_kernel(%arg0: memref<25x2048xbf16, #tpu.memory_space<vmem>>, %arg1: memref<6x25xbf16, #tpu.memory_space<vmem>>, %arg2: memref<6x1xf32, #tpu.memory_space<vmem>>, %arg3: memref<6x512xbf16, #tpu.memory_space<vmem>>) attributes {dimension_semantics = [], scalar_prefetch = 0 : i64, scratch_operands = 0 : i64, tpu.core_type = #tpu.core_type<tc>} {
    %c0 = arith.constant 0 : index
    %c0_0 = arith.constant 0 : index
    %0 = vector.load %arg1[%c0, %c0_0] : memref<6x25xbf16, #tpu.memory_space<vmem>>, vector<6x25xbf16>
    %c0_1 = arith.constant 0 : index
    %c0_2 = arith.constant 0 : index
    %1 = vector.load %arg0[%c0_1, %c0_2] : memref<25x2048xbf16, #tpu.memory_space<vmem>>, vector<25x2048xbf16>
    %cst = arith.constant dense<0.000000e+00> : vector<6x2048xf32>
    %2 = tpu.matmul %0, %1, %cst {dimension_numbers = #tpu.dot_dimension_numbers<[1], [0], [0], [1], [0, 0, 1, 1], [], []>} : vector<6x25xbf16>, vector<25x2048xbf16>, vector<6x2048xf32> -> vector<6x2048xf32>
    %3 = vector.extract_strided_slice %2 {offsets = [0, 0], sizes = [6, 512], strides = [1, 1]} : vector<6x2048xf32> to vector<6x512xf32>
    %4 = vector.extract_strided_slice %2 {offsets = [0, 512], sizes = [6, 512], strides = [1, 1]} : vector<6x2048xf32> to vector<6x512xf32>
    %5 = arith.maximumf %3, %4 : vector<6x512xf32>
    %6 = vector.extract_strided_slice %2 {offsets = [0, 1024], sizes = [6, 512], strides = [1, 1]} : vector<6x2048xf32> to vector<6x512xf32>
    %7 = vector.extract_strided_slice %2 {offsets = [0, 1536], sizes = [6, 512], strides = [1, 1]} : vector<6x2048xf32> to vector<6x512xf32>
    %8 = arith.maximumf %6, %7 : vector<6x512xf32>
    %9 = arith.maximumf %5, %8 : vector<6x512xf32>
    %c0_3 = arith.constant 0 : index
    %c0_4 = arith.constant 0 : index
    %10 = vector.load %arg2[%c0_3, %c0_4] : memref<6x1xf32, #tpu.memory_space<vmem>>, vector<6x1xf32>
    %11 = vector.broadcast %10 : vector<6x1xf32> to vector<6x512xf32>
    %12 = arith.addf %9, %11 : vector<6x512xf32>
    %cst_5 = arith.constant 0.000000e+00 : f32
    %13 = vector.broadcast %cst_5 : f32 to vector<6x512xf32>
    %14 = arith.maximumf %12, %13 : vector<6x512xf32>
    %15 = arith.truncf %14 : vector<6x512xf32> to vector<6x512xbf16>
    %c0_6 = arith.constant 0 : index
    %c0_7 = arith.constant 0 : index
    %16 = vector.load %arg3[%c0_6, %c0_7] : memref<6x512xbf16, #tpu.memory_space<vmem>>, vector<6x512xbf16>
    tpu.vector_store %arg3[%c0_6, %c0_7], %15 {strides = array<i32>} : memref<6x512xbf16, #tpu.memory_space<vmem>>, vector<6x512xbf16>,
    return
  }
}

module attributes {stable_mosaic.version = 11 : i64} {
  func.func @conv2_fc_kernel(%arg0: memref<150x512xbf16, #tpu.memory_space<vmem>>, %arg1: memref<16x150xbf16, #tpu.memory_space<vmem>>, %arg2: memref<16x1xf32, #tpu.memory_space<vmem>>, %arg3: memref<128x3200xbf16, #tpu.memory_space<vmem>>, %arg4: memref<120x400xbf16, #tpu.memory_space<vmem>>, %arg5: memref<120x1xf32, #tpu.memory_space<vmem>>, %arg6: memref<84x120xbf16, #tpu.memory_space<vmem>>, %arg7: memref<84x1xf32, #tpu.memory_space<vmem>>, %arg8: memref<3x84xbf16, #tpu.memory_space<vmem>>, %arg9: memref<3x1xf32, #tpu.memory_space<vmem>>, %arg10: memref<3x128xf32, #tpu.memory_space<vmem>>) attributes {dimension_semantics = [], scalar_prefetch = 0 : i64, scratch_operands = 0 : i64, tpu.core_type = #tpu.core_type<tc>} {
    %c0 = arith.constant 0 : index
    %c0_0 = arith.constant 0 : index
    %0 = vector.load %arg1[%c0, %c0_0] : memref<16x150xbf16, #tpu.memory_space<vmem>>, vector<16x150xbf16>
    %c0_1 = arith.constant 0 : index
    %c0_2 = arith.constant 0 : index
    %1 = vector.load %arg0[%c0_1, %c0_2] : memref<150x512xbf16, #tpu.memory_space<vmem>>, vector<150x512xbf16>
    %cst = arith.constant dense<0.000000e+00> : vector<16x512xf32>
    %2 = tpu.matmul %0, %1, %cst {dimension_numbers = #tpu.dot_dimension_numbers<[1], [0], [0], [1], [0, 0, 1, 1], [], []>} : vector<16x150xbf16>, vector<150x512xbf16>, vector<16x512xf32> -> vector<16x512xf32>
    %3 = vector.extract_strided_slice %2 {offsets = [0, 0], sizes = [16, 128], strides = [1, 1]} : vector<16x512xf32> to vector<16x128xf32>
    %4 = vector.extract_strided_slice %2 {offsets = [0, 128], sizes = [16, 128], strides = [1, 1]} : vector<16x512xf32> to vector<16x128xf32>
    %5 = arith.maximumf %3, %4 : vector<16x128xf32>
    %6 = vector.extract_strided_slice %2 {offsets = [0, 256], sizes = [16, 128], strides = [1, 1]} : vector<16x512xf32> to vector<16x128xf32>
    %7 = vector.extract_strided_slice %2 {offsets = [0, 384], sizes = [16, 128], strides = [1, 1]} : vector<16x512xf32> to vector<16x128xf32>
    %8 = arith.maximumf %6, %7 : vector<16x128xf32>
    %9 = arith.maximumf %5, %8 : vector<16x128xf32>
    %c0_3 = arith.constant 0 : index
    %c0_4 = arith.constant 0 : index
    %10 = vector.load %arg2[%c0_3, %c0_4] : memref<16x1xf32, #tpu.memory_space<vmem>>, vector<16x1xf32>
    %11 = vector.broadcast %10 : vector<16x1xf32> to vector<16x128xf32>
    %12 = arith.addf %9, %11 : vector<16x128xf32>
    %cst_5 = arith.constant 0.000000e+00 : f32
    %13 = vector.broadcast %cst_5 : f32 to vector<16x128xf32>
    %14 = arith.maximumf %12, %13 : vector<16x128xf32>
    %15 = arith.truncf %14 : vector<16x128xf32> to vector<16x128xbf16>
    %c0_6 = arith.constant 0 : index
    %c0_7 = arith.constant 0 : index
    %16 = vector.load %arg3[%c0_6, %c0_7] : memref<128x3200xbf16, #tpu.memory_space<vmem>>, vector<128x3200xbf16>
    %cst_8 = arith.constant dense<0.000000e+00> : vector<16x3200xf32>
    %17 = tpu.matmul %15, %16, %cst_8 {dimension_numbers = #tpu.dot_dimension_numbers<[1], [0], [0], [1], [0, 0, 1, 1], [], []>} : vector<16x128xbf16>, vector<128x3200xbf16>, vector<16x3200xf32> -> vector<16x3200xf32>
    %18 = arith.truncf %17 : vector<16x3200xf32> to vector<16x3200xbf16>
    %19 = vector.extract_strided_slice %18 {offsets = [0, 0], sizes = [16, 128], strides = [1, 1]} : vector<16x3200xbf16> to vector<16x128xbf16>
    %20 = vector.extract_strided_slice %18 {offsets = [0, 128], sizes = [16, 128], strides = [1, 1]} : vector<16x3200xbf16> to vector<16x128xbf16>
    %21 = vector.extract_strided_slice %18 {offsets = [0, 256], sizes = [16, 128], strides = [1, 1]} : vector<16x3200xbf16> to vector<16x128xbf16>
    %22 = vector.extract_strided_slice %18 {offsets = [0, 384], sizes = [16, 128], strides = [1, 1]} : vector<16x3200xbf16> to vector<16x128xbf16>
    %23 = vector.extract_strided_slice %18 {offsets = [0, 512], sizes = [16, 128], strides = [1, 1]} : vector<16x3200xbf16> to vector<16x128xbf16>
    %24 = vector.extract_strided_slice %18 {offsets = [0, 640], sizes = [16, 128], strides = [1, 1]} : vector<16x3200xbf16> to vector<16x128xbf16>
    %25 = vector.extract_strided_slice %18 {offsets = [0, 768], sizes = [16, 128], strides = [1, 1]} : vector<16x3200xbf16> to vector<16x128xbf16>
    %26 = vector.extract_strided_slice %18 {offsets = [0, 896], sizes = [16, 128], strides = [1, 1]} : vector<16x3200xbf16> to vector<16x128xbf16>
    %27 = vector.extract_strided_slice %18 {offsets = [0, 1024], sizes = [16, 128], strides = [1, 1]} : vector<16x3200xbf16> to vector<16x128xbf16>
    %28 = vector.extract_strided_slice %18 {offsets = [0, 1152], sizes = [16, 128], strides = [1, 1]} : vector<16x3200xbf16> to vector<16x128xbf16>
    %29 = vector.extract_strided_slice %18 {offsets = [0, 1280], sizes = [16, 128], strides = [1, 1]} : vector<16x3200xbf16> to vector<16x128xbf16>
    %30 = vector.extract_strided_slice %18 {offsets = [0, 1408], sizes = [16, 128], strides = [1, 1]} : vector<16x3200xbf16> to vector<16x128xbf16>
    %31 = vector.extract_strided_slice %18 {offsets = [0, 1536], sizes = [16, 128], strides = [1, 1]} : vector<16x3200xbf16> to vector<16x128xbf16>
    %32 = vector.extract_strided_slice %18 {offsets = [0, 1664], sizes = [16, 128], strides = [1, 1]} : vector<16x3200xbf16> to vector<16x128xbf16>
    %33 = vector.extract_strided_slice %18 {offsets = [0, 1792], sizes = [16, 128], strides = [1, 1]} : vector<16x3200xbf16> to vector<16x128xbf16>
    %34 = vector.extract_strided_slice %18 {offsets = [0, 1920], sizes = [16, 128], strides = [1, 1]} : vector<16x3200xbf16> to vector<16x128xbf16>
    %35 = vector.extract_strided_slice %18 {offsets = [0, 2048], sizes = [16, 128], strides = [1, 1]} : vector<16x3200xbf16> to vector<16x128xbf16>
    %36 = vector.extract_strided_slice %18 {offsets = [0, 2176], sizes = [16, 128], strides = [1, 1]} : vector<16x3200xbf16> to vector<16x128xbf16>
    %37 = vector.extract_strided_slice %18 {offsets = [0, 2304], sizes = [16, 128], strides = [1, 1]} : vector<16x3200xbf16> to vector<16x128xbf16>
    %38 = vector.extract_strided_slice %18 {offsets = [0, 2432], sizes = [16, 128], strides = [1, 1]} : vector<16x3200xbf16> to vector<16x128xbf16>
    %39 = vector.extract_strided_slice %18 {offsets = [0, 2560], sizes = [16, 128], strides = [1, 1]} : vector<16x3200xbf16> to vector<16x128xbf16>
    %40 = vector.extract_strided_slice %18 {offsets = [0, 2688], sizes = [16, 128], strides = [1, 1]} : vector<16x3200xbf16> to vector<16x128xbf16>
    %41 = vector.extract_strided_slice %18 {offsets = [0, 2816], sizes = [16, 128], strides = [1, 1]} : vector<16x3200xbf16> to vector<16x128xbf16>
    %42 = vector.extract_strided_slice %18 {offsets = [0, 2944], sizes = [16, 128], strides = [1, 1]} : vector<16x3200xbf16> to vector<16x128xbf16>
    %43 = vector.extract_strided_slice %18 {offsets = [0, 3072], sizes = [16, 128], strides = [1, 1]} : vector<16x3200xbf16> to vector<16x128xbf16>
    %44 = tpu.concatenate %19, %20, %21, %22, %23, %24, %25, %26, %27, %28, %29, %30, %31, %32, %33, %34 in 0 : vector<16x128xbf16>, vector<16x128xbf16>, vector<16x128xbf16>, vector<16x128xbf16>, vector<16x128xbf16>, vector<16x128xbf16>, vector<16x128xbf16>, vector<16x128xbf16>, vector<16x128xbf16>, vector<16x128xbf16>, vector<16x128xbf16>, vector<16x128xbf16>, vector<16x128xbf16>, vector<16x128xbf16>, vector<16x128xbf16>, vector<16x128xbf16> -> vector<256x128xbf16>
    %45 = tpu.concatenate %35, %36, %37, %38, %39, %40, %41, %42, %43 in 0 : vector<16x128xbf16>, vector<16x128xbf16>, vector<16x128xbf16>, vector<16x128xbf16>, vector<16x128xbf16>, vector<16x128xbf16>, vector<16x128xbf16>, vector<16x128xbf16>, vector<16x128xbf16> -> vector<144x128xbf16>
    %46 = tpu.concatenate %44, %45 in 0 : vector<256x128xbf16>, vector<144x128xbf16> -> vector<400x128xbf16>
    %c0_9 = arith.constant 0 : index
    %c0_10 = arith.constant 0 : index
    %47 = vector.load %arg4[%c0_9, %c0_10] : memref<120x400xbf16, #tpu.memory_space<vmem>>, vector<120x400xbf16>
    %cst_11 = arith.constant dense<0.000000e+00> : vector<120x128xf32>
    %48 = tpu.matmul %47, %46, %cst_11 {dimension_numbers = #tpu.dot_dimension_numbers<[1], [0], [0], [1], [0, 0, 1, 1], [], []>} : vector<120x400xbf16>, vector<400x128xbf16>, vector<120x128xf32> -> vector<120x128xf32>
    %c0_12 = arith.constant 0 : index
    %c0_13 = arith.constant 0 : index
    %49 = vector.load %arg5[%c0_12, %c0_13] : memref<120x1xf32, #tpu.memory_space<vmem>>, vector<120x1xf32>
    %50 = vector.broadcast %49 : vector<120x1xf32> to vector<120x128xf32>
    %51 = arith.addf %48, %50 : vector<120x128xf32>
    %cst_14 = arith.constant 0.000000e+00 : f32
    %52 = vector.broadcast %cst_14 : f32 to vector<120x128xf32>
    %53 = arith.maximumf %51, %52 : vector<120x128xf32>
    %c0_15 = arith.constant 0 : index
    %c0_16 = arith.constant 0 : index
    %54 = vector.load %arg6[%c0_15, %c0_16] : memref<84x120xbf16, #tpu.memory_space<vmem>>, vector<84x120xbf16>
    %55 = arith.truncf %53 : vector<120x128xf32> to vector<120x128xbf16>
    %cst_17 = arith.constant dense<0.000000e+00> : vector<84x128xf32>
    %56 = tpu.matmul %54, %55, %cst_17 {dimension_numbers = #tpu.dot_dimension_numbers<[1], [0], [0], [1], [0, 0, 1, 1], [], []>} : vector<84x120xbf16>, vector<120x128xbf16>, vector<84x128xf32> -> vector<84x128xf32>
    %c0_18 = arith.constant 0 : index
    %c0_19 = arith.constant 0 : index
    %57 = vector.load %arg7[%c0_18, %c0_19] : memref<84x1xf32, #tpu.memory_space<vmem>>, vector<84x1xf32>
    %58 = vector.broadcast %57 : vector<84x1xf32> to vector<84x128xf32>
    %59 = arith.addf %56, %58 : vector<84x128xf32>
    %cst_20 = arith.constant 0.000000e+00 : f32
    %60 = vector.broadcast %cst_20 : f32 to vector<84x128xf32>
    %61 = arith.maximumf %59, %60 : vector<84x128xf32>
    %c0_21 = arith.constant 0 : index
    %c0_22 = arith.constant 0 : index
    %62 = vector.load %arg8[%c0_21, %c0_22] : memref<3x84xbf16, #tpu.memory_space<vmem>>, vector<3x84xbf16>
    %63 = arith.truncf %61 : vector<84x128xf32> to vector<84x128xbf16>
    %cst_23 = arith.constant dense<0.000000e+00> : vector<3x128xf32>
    %64 = tpu.matmul %62, %63, %cst_23 {dimension_numbers = #tpu.dot_dimension_numbers<[1], [0], [0], [1], [0, 0, 1, 1], [], []>} : vector<3x84xbf16>, vector<84x128xbf16>, vector<3x128xf32> -> vector<3x128xf32>
    %c0_24 = arith.constant 0 : index
    %c0_25 = arith.constant 0 : index
    %65 = vector.load %arg9[%c0_24, %c0_25] : memref<3x1xf32, #tpu.memory_space<vmem>>, vector<3x1xf32>
    %66 = vector.broadcast %65 : vector<3x1xf32> to vector<3x128xf32>
    %67 = arith.addf %64, %66 : vector<3x128xf32>
    %c0_26 = arith.constant 0 : index
    %c0_27 = arith.constant 0 : index
    %68 = vector.load %arg10[%c0_26, %c0_27] : memref<3x128xf32, #tpu.memory_space<vmem>>, vector<3x128xf32>
    tpu.vector_store %arg10[%c0_26, %c0_27], %67 {strides = array<i32>} : memref<3x128xf32, #tpu.memory_space<vmem>>, vector<3x128xf32>,
    return
  }
}

</mosaic_0001>

<llo_original>
// kernel: lenet_forward.2
$region0: #{lenet_forward.2}
  #allocation0 [shape = 'u32[]', space=smem, size = 0x4, offset = 0x4, fixed_abs, tag = 'smem constant byte address 0x4 - core index']
  #allocation1 [shape = 'u32[72,128]{1,0:T(1,128)}', space=vmem, size = 0x9000, scoped, tag = 'internal scratch']
  %s0 = inlined_call_operand.vmem [shape: bf16[25,2048], index: 0, kind: input, shape index: {}]
  %s1 = inlined_call_operand.vmem [shape: bf16[6,25], index: 1, kind: input, shape index: {}]
  %s2 = inlined_call_operand.vmem [shape: f32[6,1], index: 2, kind: input, shape index: {}]
  %s3 = inlined_call_operand.vmem [shape: bf16[6,512], index: 3, kind: output, shape index: {}]
  %s4 = sld [smem:[#allocation0]]
  $region22: #{lenet_forward.2} parent=0
    _
  %s6 = ssub.s32 1, %s4
  %s7 = scalar_select 0, %s6, %s4
  // Predicated region
  $region2: #{lenet_forward.2} parent=0 // pred_check
    _
  $region3: #{lenet_forward.2} parent=0 // pred_check_branch
    %9 = sbr.rel (0) target = $region5
  $region4: #{lenet_forward.2} parent=0 // pred_region
    _
  $region5: #{lenet_forward.2} parent=0 // pred_fallthru
    _
  // Predicated region
  $region6: #{lenet_forward.2} parent=0 // pred_check
    _
  $region7: #{lenet_forward.2} parent=0 // pred_check_branch
    %11 = sbr.rel (0) target = $region9
  $region8: #{lenet_forward.2} parent=0 // pred_region
    _
  $region9: #{lenet_forward.2} parent=0 // pred_fallthru
    _
  // Predicated region
  $region10: #{lenet_forward.2} parent=0 // pred_check
    _
  $region11: #{lenet_forward.2} parent=0 // pred_check_branch
    %13 = sbr.rel (0) target = $region13
  $region12: #{lenet_forward.2} parent=0 // pred_region
    _
  $region13: #{lenet_forward.2} parent=0 // pred_fallthru
    _
  %v15 = vld [vmem:[%s1] sm:$0x7]
  %v16 = vld [vmem:[%s0] sm:$0xff]
  %v17 = vld [vmem:[%s0 + $0x8] sm:$0xff]
  %v18 = vld [vmem:[%s0 + $0x10] sm:$0xff]
  %v19 = vld [vmem:[%s0 + $0x18] sm:$0xff]
  %v20 = vld [vmem:[%s0 + $0x20] sm:$0xff]
  %v21 = vld [vmem:[%s0 + $0x28] sm:$0xff]
  %v22 = vld [vmem:[%s0 + $0x30] sm:$0xff]
  %v23 = vld [vmem:[%s0 + $0x38] sm:$0xff]
  %v24 = vld [vmem:[%s0 + $0x40] sm:$0xff]
  %v25 = vld [vmem:[%s0 + $0x48] sm:$0xff]
  %v26 = vld [vmem:[%s0 + $0x50] sm:$0xff]
  %v27 = vld [vmem:[%s0 + $0x58] sm:$0xff]
  %v28 = vld [vmem:[%s0 + $0x60] sm:$0xff]
  %v29 = vld [vmem:[%s0 + $0x68] sm:$0xff]
  %v30 = vld [vmem:[%s0 + $0x70] sm:$0xff]
  %v31 = vld [vmem:[%s0 + $0x78] sm:$0xff]
  %v32 = vld [vmem:[%s0 + $0x80] sm:$0xff]
  %v33 = vld [vmem:[%s0 + $0x88] sm:$0xff]
  %v34 = vld [vmem:[%s0 + $0x90] sm:$0xff]
  %v35 = vld [vmem:[%s0 + $0x98] sm:$0xff]
  %v36 = vld [vmem:[%s0 + $0xa0] sm:$0xff]
  %v37 = vld [vmem:[%s0 + $0xa8] sm:$0xff]
  %v38 = vld [vmem:[%s0 + $0xb0] sm:$0xff]
  %v39 = vld [vmem:[%s0 + $0xb8] sm:$0xff]
  %v40 = vld [vmem:[%s0 + $0xc0] sm:$0x11]
  %v41 = vld [vmem:[%s0 + $0xc8] sm:$0x11]
  %v42 = vld [vmem:[%s0 + $0xd0] sm:$0x11]
  %v43 = vld [vmem:[%s0 + $0xd8] sm:$0x11]
  %v44 = vld [vmem:[%s0 + $0xe0] sm:$0x11]
  %v45 = vld [vmem:[%s0 + $0xe8] sm:$0x11]
  %v46 = vld [vmem:[%s0 + $0xf0] sm:$0x11]
  %v47 = vld [vmem:[%s0 + $0xf8] sm:$0x11]
  %v80 = vunpack.c.l.b16 %v16
  %v81 = vunpack.c.h.b16 %v16
  %v82 = vunpack.c.l.b16 %v17
  %v83 = vunpack.c.h.b16 %v17
  %v84 = vunpack.c.l.b16 %v18
  %v85 = vunpack.c.h.b16 %v18
  %v86 = vunpack.c.l.b16 %v19
  %v87 = vunpack.c.h.b16 %v19
  %v88 = vunpack.c.l.b16 %v20
  %v89 = vunpack.c.h.b16 %v20
  %v90 = vunpack.c.l.b16 %v21
  %v91 = vunpack.c.h.b16 %v21
  %v92 = vunpack.c.l.b16 %v22
  %v93 = vunpack.c.h.b16 %v22
  %v94 = vunpack.c.l.b16 %v23
  %v95 = vunpack.c.h.b16 %v23
  %v96 = vunpack.c.l.b16 %v24
  %v97 = vunpack.c.h.b16 %v24
  %v98 = vunpack.c.l.b16 %v25
  %v99 = vunpack.c.h.b16 %v25
  %v100 = vunpack.c.l.b16 %v26
  %v101 = vunpack.c.h.b16 %v26
  %v102 = vunpack.c.l.b16 %v27
  %v103 = vunpack.c.h.b16 %v27
  %v104 = vunpack.c.l.b16 %v28
  %v105 = vunpack.c.h.b16 %v28
  %v106 = vunpack.c.l.b16 %v29
  %v107 = vunpack.c.h.b16 %v29
  %v108 = vunpack.c.l.b16 %v30
  %v109 = vunpack.c.h.b16 %v30
  %v110 = vunpack.c.l.b16 %v31
  %v111 = vunpack.c.h.b16 %v31
  %v112 = vunpack.c.l.b16 %v32
  %v113 = vunpack.c.h.b16 %v32
  %v114 = vunpack.c.l.b16 %v33
  %v115 = vunpack.c.h.b16 %v33
  %v116 = vunpack.c.l.b16 %v34
  %v117 = vunpack.c.h.b16 %v34
  %v118 = vunpack.c.l.b16 %v35
  %v119 = vunpack.c.h.b16 %v35
  %v120 = vunpack.c.l.b16 %v36
  %v121 = vunpack.c.h.b16 %v36
  %v122 = vunpack.c.l.b16 %v37
  %v123 = vunpack.c.h.b16 %v37
  %v124 = vunpack.c.l.b16 %v38
  %v125 = vunpack.c.h.b16 %v38
  %v126 = vunpack.c.l.b16 %v39
  %v127 = vunpack.c.h.b16 %v39
  %v128 = vunpack.c.l.b16 %v40
  %v129 = vunpack.c.h.b16 %v40
  %v130 = vunpack.c.l.b16 %v41
  %v131 = vunpack.c.h.b16 %v41
  %v132 = vunpack.c.l.b16 %v42
  %v133 = vunpack.c.h.b16 %v42
  %v134 = vunpack.c.l.b16 %v43
  %v135 = vunpack.c.h.b16 %v43
  %v136 = vunpack.c.l.b16 %v44
  %v137 = vunpack.c.h.b16 %v44
  %v138 = vunpack.c.l.b16 %v45
  %v139 = vunpack.c.h.b16 %v45
  %v140 = vunpack.c.l.b16 %v46
  %v141 = vunpack.c.h.b16 %v46
  %v142 = vunpack.c.l.b16 %v47
  %v143 = vunpack.c.h.b16 %v47
  %v144 = vpack.c.b16 %v96, %v80
  %v145 = vpack.c.b16 %v97, %v81
  %v146 = vpack.c.b16 %v98, %v82
  %v147 = vpack.c.b16 %v99, %v83
  %v148 = vpack.c.b16 %v100, %v84
  %v149 = vpack.c.b16 %v101, %v85
  %v150 = vpack.c.b16 %v102, %v86
  %v151 = vpack.c.b16 %v103, %v87
  %v152 = vpack.c.b16 %v104, %v88
  %v153 = vpack.c.b16 %v105, %v89
  %v154 = vpack.c.b16 %v106, %v90
  %v155 = vpack.c.b16 %v107, %v91
  %v156 = vpack.c.b16 %v108, %v92
  %v157 = vpack.c.b16 %v109, %v93
  %v158 = vpack.c.b16 %v110, %v94
  %v159 = vpack.c.b16 %v111, %v95
  %v160 = vpack.c.b16 %v128, %v112
  %v161 = vpack.c.b16 %v129, %v113
  %v162 = vpack.c.b16 %v130, %v114
  %v163 = vpack.c.b16 %v131, %v115
  %v164 = vpack.c.b16 %v132, %v116
  %v165 = vpack.c.b16 %v133, %v117
  %v166 = vpack.c.b16 %v134, %v118
  %v167 = vpack.c.b16 %v135, %v119
  %v168 = vpack.c.b16 %v136, %v120
  %v169 = vpack.c.b16 %v137, %v121
  %v170 = vpack.c.b16 %v138, %v122
  %v171 = vpack.c.b16 %v139, %v123
  %v172 = vpack.c.b16 %v140, %v124
  %v173 = vpack.c.b16 %v141, %v125
  %v174 = vpack.c.b16 %v142, %v126
  %v175 = vpack.c.b16 %v143, %v127
  %vm192 = vcmask 203776
  %v194 = vsel %vm192, %v15, 0
  %vm196 = vcmask 1043456
  %vm197 = vcmask 1044480
  %v198 = vsel %vm196, 4294967295, 65535
  %v199 = vsel %vm197, %v198, 0
  %v201 = vand.u32 %v160, %v199
  %v204 = vand.u32 %v161, %v199
  %v207 = vand.u32 %v162, %v199
  %v210 = vand.u32 %v163, %v199
  %v213 = vand.u32 %v164, %v199
  %v216 = vand.u32 %v165, %v199
  %v219 = vand.u32 %v166, %v199
  %v222 = vand.u32 %v167, %v199
  %v225 = vand.u32 %v168, %v199
  %v228 = vand.u32 %v169, %v199
  %v231 = vand.u32 %v170, %v199
  %v234 = vand.u32 %v171, %v199
  %v237 = vand.u32 %v172, %v199
  %v240 = vand.u32 %v173, %v199
  %v243 = vand.u32 %v174, %v199
  %v246 = vand.u32 %v175, %v199
  %248 = vmatpush.bf16.msra.mxu0 0
  %249 = vmatpush.bf16.msra.mxu0 0
  %250 = vmatpush.bf16.msra.mxu0 0
  %251 = vmatpush.bf16.msra.mxu0 0
  %252 = vmatpush.bf16.msra.mxu0 0
  %253 = vmatpush.bf16.msra.mxu0 0
  %254 = vmatpush.bf16.msra.mxu0 %v201
  %255 = vmatpush.bf16.msra.mxu0 %v144
  %256 = vmatmul.bf16.gmra.mxu0 %v194
  %v257 = vpop.f32.mrf.mxu0
  %v258 = vadd.f32 0.0, %v257
  %v259 = vpop.f32.mrf.mxu0
  %260 = vdwg.mxu0
  %261 = vmatpush.bf16.msra.mxu0 0
  %262 = vmatpush.bf16.msra.mxu0 0
  %263 = vmatpush.bf16.msra.mxu0 0
  %264 = vmatpush.bf16.msra.mxu0 0
  %265 = vmatpush.bf16.msra.mxu0 0
  %266 = vmatpush.bf16.msra.mxu0 0
  %267 = vmatpush.bf16.msra.mxu0 %v204
  %268 = vmatpush.bf16.msra.mxu0 %v145
  %269 = vmatmul.bf16.gmra.mxu0 %v194
  %v270 = vpop.f32.mrf.mxu0
  %v271 = vadd.f32 0.0, %v270
  %v272 = vpop.f32.mrf.mxu0
  %273 = vdwg.mxu0
  %274 = vmatpush.bf16.msra.mxu0 0
  %275 = vmatpush.bf16.msra.mxu0 0
  %276 = vmatpush.bf16.msra.mxu0 0
  %277 = vmatpush.bf16.msra.mxu0 0
  %278 = vmatpush.bf16.msra.mxu0 0
  %279 = vmatpush.bf16.msra.mxu0 0
  %280 = vmatpush.bf16.msra.mxu0 %v207
  %281 = vmatpush.bf16.msra.mxu0 %v146
  %282 = vmatmul.bf16.gmra.mxu0 %v194
  %v283 = vpop.f32.mrf.mxu0
  %v284 = vadd.f32 0.0, %v283
  %v285 = vpop.f32.mrf.mxu0
  %286 = vdwg.mxu0
  %287 = vmatpush.bf16.msra.mxu0 0
  %288 = vmatpush.bf16.msra.mxu0 0
  %289 = vmatpush.bf16.msra.mxu0 0
  %290 = vmatpush.bf16.msra.mxu0 0
  %291 = vmatpush.bf16.msra.mxu0 0
  %292 = vmatpush.bf16.msra.mxu0 0
  %293 = vmatpush.bf16.msra.mxu0 %v210
  %294 = vmatpush.bf16.msra.mxu0 %v147
  %295 = vmatmul.bf16.gmra.mxu0 %v194
  %v296 = vpop.f32.mrf.mxu0
  %v297 = vadd.f32 0.0, %v296
  %v298 = vpop.f32.mrf.mxu0
  %299 = vdwg.mxu0
  %300 = vmatpush.bf16.msra.mxu0 0
  %301 = vmatpush.bf16.msra.mxu0 0
  %302 = vmatpush.bf16.msra.mxu0 0
  %303 = vmatpush.bf16.msra.mxu0 0
  %304 = vmatpush.bf16.msra.mxu0 0
  %305 = vmatpush.bf16.msra.mxu0 0
  %306 = vmatpush.bf16.msra.mxu0 %v213
  %307 = vmatpush.bf16.msra.mxu0 %v148
  %308 = vmatmul.bf16.gmra.mxu0 %v194
  %v309 = vpop.f32.mrf.mxu0
  %v310 = vadd.f32 0.0, %v309
  %v311 = vpop.f32.mrf.mxu0
  %312 = vdwg.mxu0
  %313 = vmatpush.bf16.msra.mxu0 0
  %314 = vmatpush.bf16.msra.mxu0 0
  %315 = vmatpush.bf16.msra.mxu0 0
  %316 = vmatpush.bf16.msra.mxu0 0
  %317 = vmatpush.bf16.msra.mxu0 0
  %318 = vmatpush.bf16.msra.mxu0 0
  %319 = vmatpush.bf16.msra.mxu0 %v216
  %320 = vmatpush.bf16.msra.mxu0 %v149
  %321 = vmatmul.bf16.gmra.mxu0 %v194
  %v322 = vpop.f32.mrf.mxu0
  %v323 = vadd.f32 0.0, %v322
  %v324 = vpop.f32.mrf.mxu0
  %325 = vdwg.mxu0
  %326 = vmatpush.bf16.msra.mxu0 0
  %327 = vmatpush.bf16.msra.mxu0 0
  %328 = vmatpush.bf16.msra.mxu0 0
  %329 = vmatpush.bf16.msra.mxu0 0
  %330 = vmatpush.bf16.msra.mxu0 0
  %331 = vmatpush.bf16.msra.mxu0 0
  %332 = vmatpush.bf16.msra.mxu0 %v219
  %333 = vmatpush.bf16.msra.mxu0 %v150
  %334 = vmatmul.bf16.gmra.mxu0 %v194
  %v335 = vpop.f32.mrf.mxu0
  %v336 = vadd.f32 0.0, %v335
  %v337 = vpop.f32.mrf.mxu0
  %338 = vdwg.mxu0
  %339 = vmatpush.bf16.msra.mxu0 0
  %340 = vmatpush.bf16.msra.mxu0 0
  %341 = vmatpush.bf16.msra.mxu0 0
  %342 = vmatpush.bf16.msra.mxu0 0
  %343 = vmatpush.bf16.msra.mxu0 0
  %344 = vmatpush.bf16.msra.mxu0 0
  %345 = vmatpush.bf16.msra.mxu0 %v222
  %346 = vmatpush.bf16.msra.mxu0 %v151
  %347 = vmatmul.bf16.gmra.mxu0 %v194
  %v348 = vpop.f32.mrf.mxu0
  %v349 = vadd.f32 0.0, %v348
  %v350 = vpop.f32.mrf.mxu0
  %351 = vdwg.mxu0
  %352 = vmatpush.bf16.msra.mxu0 0
  %353 = vmatpush.bf16.msra.mxu0 0
  %354 = vmatpush.bf16.msra.mxu0 0
  %355 = vmatpush.bf16.msra.mxu0 0
  %356 = vmatpush.bf16.msra.mxu0 0
  %357 = vmatpush.bf16.msra.mxu0 0
  %358 = vmatpush.bf16.msra.mxu0 %v225
  %359 = vmatpush.bf16.msra.mxu0 %v152
  %360 = vmatmul.bf16.gmra.mxu0 %v194
  %v361 = vpop.f32.mrf.mxu0
  %v362 = vadd.f32 0.0, %v361
  %v363 = vpop.f32.mrf.mxu0
  %364 = vdwg.mxu0
  %365 = vmatpush.bf16.msra.mxu0 0
  %366 = vmatpush.bf16.msra.mxu0 0
  %367 = vmatpush.bf16.msra.mxu0 0
  %368 = vmatpush.bf16.msra.mxu0 0
  %369 = vmatpush.bf16.msra.mxu0 0
  %370 = vmatpush.bf16.msra.mxu0 0
  %371 = vmatpush.bf16.msra.mxu0 %v228
  %372 = vmatpush.bf16.msra.mxu0 %v153
  %373 = vmatmul.bf16.gmra.mxu0 %v194
  %v374 = vpop.f32.mrf.mxu0
  %v375 = vadd.f32 0.0, %v374
  %v376 = vpop.f32.mrf.mxu0
  %377 = vdwg.mxu0
  %378 = vmatpush.bf16.msra.mxu0 0
  %379 = vmatpush.bf16.msra.mxu0 0
  %380 = vmatpush.bf16.msra.mxu0 0
  %381 = vmatpush.bf16.msra.mxu0 0
  %382 = vmatpush.bf16.msra.mxu0 0
  %383 = vmatpush.bf16.msra.mxu0 0
  %384 = vmatpush.bf16.msra.mxu0 %v231
  %385 = vmatpush.bf16.msra.mxu0 %v154
  %386 = vmatmul.bf16.gmra.mxu0 %v194
  %v387 = vpop.f32.mrf.mxu0
  %v388 = vadd.f32 0.0, %v387
  %v389 = vpop.f32.mrf.mxu0
  %390 = vdwg.mxu0
  %391 = vmatpush.bf16.msra.mxu0 0
  %392 = vmatpush.bf16.msra.mxu0 0
  %393 = vmatpush.bf16.msra.mxu0 0
  %394 = vmatpush.bf16.msra.mxu0 0
  %395 = vmatpush.bf16.msra.mxu0 0
  %396 = vmatpush.bf16.msra.mxu0 0
  %397 = vmatpush.bf16.msra.mxu0 %v234
  %398 = vmatpush.bf16.msra.mxu0 %v155
  %399 = vmatmul.bf16.gmra.mxu0 %v194
  %v400 = vpop.f32.mrf.mxu0
  %v401 = vadd.f32 0.0, %v400
  %v402 = vpop.f32.mrf.mxu0
  %403 = vdwg.mxu0
  %404 = vmatpush.bf16.msra.mxu0 0
  %405 = vmatpush.bf16.msra.mxu0 0
  %406 = vmatpush.bf16.msra.mxu0 0
  %407 = vmatpush.bf16.msra.mxu0 0
  %408 = vmatpush.bf16.msra.mxu0 0
  %409 = vmatpush.bf16.msra.mxu0 0
  %410 = vmatpush.bf16.msra.mxu0 %v237
  %411 = vmatpush.bf16.msra.mxu0 %v156
  %412 = vmatmul.bf16.gmra.mxu0 %v194
  %v413 = vpop.f32.mrf.mxu0
  %v414 = vadd.f32 0.0, %v413
  %v415 = vpop.f32.mrf.mxu0
  %416 = vdwg.mxu0
  %417 = vmatpush.bf16.msra.mxu0 0
  %418 = vmatpush.bf16.msra.mxu0 0
  %419 = vmatpush.bf16.msra.mxu0 0
  %420 = vmatpush.bf16.msra.mxu0 0
  %421 = vmatpush.bf16.msra.mxu0 0
  %422 = vmatpush.bf16.msra.mxu0 0
  %423 = vmatpush.bf16.msra.mxu0 %v240
  %424 = vmatpush.bf16.msra.mxu0 %v157
  %425 = vmatmul.bf16.gmra.mxu0 %v194
  %v426 = vpop.f32.mrf.mxu0
  %v427 = vadd.f32 0.0, %v426
  %v428 = vpop.f32.mrf.mxu0
  %429 = vdwg.mxu0
  %430 = vmatpush.bf16.msra.mxu0 0
  %431 = vmatpush.bf16.msra.mxu0 0
  %432 = vmatpush.bf16.msra.mxu0 0
  %433 = vmatpush.bf16.msra.mxu0 0
  %434 = vmatpush.bf16.msra.mxu0 0
  %435 = vmatpush.bf16.msra.mxu0 0
  %436 = vmatpush.bf16.msra.mxu0 %v243
  %437 = vmatpush.bf16.msra.mxu0 %v158
  %438 = vmatmul.bf16.gmra.mxu0 %v194
  %v439 = vpop.f32.mrf.mxu0
  %v440 = vadd.f32 0.0, %v439
  %v441 = vpop.f32.mrf.mxu0
  %442 = vdwg.mxu0
  %443 = vmatpush.bf16.msra.mxu0 0
  %444 = vmatpush.bf16.msra.mxu0 0
  %445 = vmatpush.bf16.msra.mxu0 0
  %446 = vmatpush.bf16.msra.mxu0 0
  %447 = vmatpush.bf16.msra.mxu0 0
  %448 = vmatpush.bf16.msra.mxu0 0
  %449 = vmatpush.bf16.msra.mxu0 %v246
  %450 = vmatpush.bf16.msra.mxu0 %v159
  %451 = vmatmul.bf16.gmra.mxu0 %v194
  %v452 = vpop.f32.mrf.mxu0
  %v453 = vadd.f32 0.0, %v452
  %v454 = vpop.f32.mrf.mxu0
  %455 = vdwg.mxu0
  %v456 = vmax.f32 %v258, %v310
  %v457 = vmax.f32 %v271, %v323
  %v458 = vmax.f32 %v284, %v336
  %v459 = vmax.f32 %v297, %v349
  %v460 = vmax.f32 %v362, %v414
  %v461 = vmax.f32 %v375, %v427
  %v462 = vmax.f32 %v388, %v440
  %v463 = vmax.f32 %v401, %v453
  %v464 = vmax.f32 %v456, %v460
  %v465 = vmax.f32 %v457, %v461
  %v466 = vmax.f32 %v458, %v462
  %v467 = vmax.f32 %v459, %v463
  %v468 = vld [vmem:[%s2] sm:$0x3f]
  %470 = vset.pattern.permute.xlu0 0
  %471 = vperm.xlu0 %470, %v468
  %v472 = vpop.permute.xlu0 %471
  %v474 = vadd.f32 %v464, %v472
  %v475 = vadd.f32 %v465, %v472
  %v476 = vadd.f32 %v466, %v472
  %v477 = vadd.f32 %v467, %v472
  %v478 = vmax.f32 %v474, 0.0
  %v479 = vmax.f32 %v475, 0.0
  %v480 = vmax.f32 %v476, 0.0
  %v481 = vmax.f32 %v477, 0.0
  %v482 = vpack.c.bf16 %v479, %v478
  %v483 = vpack.c.bf16 %v481, %v480
  %484 = vst [vmem:[%s3] sm:$0x77] %v482
  %485 = vst [vmem:[%s3 + $0x8] sm:$0x77] %v483
  // Predicated region
  $region14: #{lenet_forward.2} parent=0 // pred_check
    _
  $region15: #{lenet_forward.2} parent=0 // pred_check_branch
    %487 = sbr.rel (0) target = $region17
  $region16: #{lenet_forward.2} parent=0 // pred_region
    _
  $region17: #{lenet_forward.2} parent=0 // pred_fallthru
    _
  // Predicated region
  $region18: #{lenet_forward.2} parent=0 // pred_check
    _
  $region19: #{lenet_forward.2} parent=0 // pred_check_branch
    %489 = sbr.rel (0) target = $region21
  $region20: #{lenet_forward.2} parent=0 // pred_region
    _
  $region21: #{lenet_forward.2} parent=0 // pred_fallthru
    _

// kernel: lenet_forward.3
$region0: #{lenet_forward.3}
  #allocation0 [shape = 'u32[]', space=smem, size = 0x4, offset = 0x4, fixed_abs, tag = 'smem constant byte address 0x4 - core index']
  #allocation1 [shape = 'u32[72,128]{1,0:T(1,128)}', space=vmem, size = 0x9000, scoped, tag = 'internal scratch']
  %s0 = inlined_call_operand.vmem [shape: bf16[150,512], index: 0, kind: input, shape index: {}]
  %s1 = inlined_call_operand.vmem [shape: bf16[16,150], index: 1, kind: input, shape index: {}]
  %s2 = inlined_call_operand.vmem [shape: f32[16,1], index: 2, kind: input, shape index: {}]
  %s3 = inlined_call_operand.vmem [shape: bf16[128,3200], index: 3, kind: input, shape index: {}]
  %s4 = inlined_call_operand.vmem [shape: bf16[120,400], index: 4, kind: input, shape index: {}]
  %s5 = inlined_call_operand.vmem [shape: f32[120,1], index: 5, kind: input, shape index: {}]
  %s6 = inlined_call_operand.vmem [shape: bf16[84,120], index: 6, kind: input, shape index: {}]
  %s7 = inlined_call_operand.vmem [shape: f32[84,1], index: 7, kind: input, shape index: {}]
  %s8 = inlined_call_operand.vmem [shape: bf16[3,84], index: 8, kind: input, shape index: {}]
  %s9 = inlined_call_operand.vmem [shape: f32[3,1], index: 9, kind: input, shape index: {}]
  %s10 = inlined_call_operand.vmem [shape: f32[3,128], index: 10, kind: output, shape index: {}]
  %s11 = sld [smem:[#allocation0]]
  $region50: #{lenet_forward.3} parent=0
    _
  %s13 = ssub.s32 1, %s11
  %s14 = scalar_select 0, %s13, %s11
  // Predicated region
  $region2: #{lenet_forward.3} parent=0 // pred_check
    _
  $region3: #{lenet_forward.3} parent=0 // pred_check_branch
    %16 = sbr.rel (0) target = $region5
  $region4: #{lenet_forward.3} parent=0 // pred_region
    _
  $region5: #{lenet_forward.3} parent=0 // pred_fallthru
    _
  // Predicated region
  $region6: #{lenet_forward.3} parent=0 // pred_check
    _
  $region7: #{lenet_forward.3} parent=0 // pred_check_branch
    %18 = sbr.rel (0) target = $region9
  $region8: #{lenet_forward.3} parent=0 // pred_region
    _
  $region9: #{lenet_forward.3} parent=0 // pred_fallthru
    _
  // Predicated region
  $region10: #{lenet_forward.3} parent=0 // pred_check
    _
  $region11: #{lenet_forward.3} parent=0 // pred_check_branch
    %20 = sbr.rel (0) target = $region13
  $region12: #{lenet_forward.3} parent=0 // pred_region
    _
  $region13: #{lenet_forward.3} parent=0 // pred_fallthru
    _
  // Predicated region
  $region14: #{lenet_forward.3} parent=0 // pred_check
    _
  $region15: #{lenet_forward.3} parent=0 // pred_check_branch
    %22 = sbr.rel (0) target = $region17
  $region16: #{lenet_forward.3} parent=0 // pred_region
    _
  $region17: #{lenet_forward.3} parent=0 // pred_fallthru
    _
  // Predicated region
  $region18: #{lenet_forward.3} parent=0 // pred_check
    _
  $region19: #{lenet_forward.3} parent=0 // pred_check_branch
    %24 = sbr.rel (0) target = $region21
  $region20: #{lenet_forward.3} parent=0 // pred_region
    _
  $region21: #{lenet_forward.3} parent=0 // pred_fallthru
    _
  // Predicated region
  $region22: #{lenet_forward.3} parent=0 // pred_check
    _
  $region23: #{lenet_forward.3} parent=0 // pred_check_branch
    %26 = sbr.rel (0) target = $region25
  $region24: #{lenet_forward.3} parent=0 // pred_region
    _
  $region25: #{lenet_forward.3} parent=0 // pred_fallthru
    _
  // Predicated region
  $region26: #{lenet_forward.3} parent=0 // pred_check
    _
  $region27: #{lenet_forward.3} parent=0 // pred_check_branch
    %28 = sbr.rel (0) target = $region29
  $region28: #{lenet_forward.3} parent=0 // pred_region
    _
  $region29: #{lenet_forward.3} parent=0 // pred_fallthru
    _
  // Predicated region
  $region30: #{lenet_forward.3} parent=0 // pred_check
    _
  $region31: #{lenet_forward.3} parent=0 // pred_check_branch
    %30 = sbr.rel (0) target = $region33
  $region32: #{lenet_forward.3} parent=0 // pred_region
    _
  $region33: #{lenet_forward.3} parent=0 // pred_fallthru
    _
  // Predicated region
  $region34: #{lenet_forward.3} parent=0 // pred_check
    _
  $region35: #{lenet_forward.3} parent=0 // pred_check_branch
    %32 = sbr.rel (0) target = $region37
  $region36: #{lenet_forward.3} parent=0 // pred_region
    _
  $region37: #{lenet_forward.3} parent=0 // pred_fallthru
    _
  // Predicated region
  $region38: #{lenet_forward.3} parent=0 // pred_check
    _
  $region39: #{lenet_forward.3} parent=0 // pred_check_branch
    %34 = sbr.rel (0) target = $region41
  $region40: #{lenet_forward.3} parent=0 // pred_region
    _
  $region41: #{lenet_forward.3} parent=0 // pred_fallthru
    _
  %v36 = vld [vmem:[%s1] sm:$0xff]
  %v37 = vld [vmem:[%s1 + $0x8] sm:$0xff]
  %v38 = vld [vmem:[%s0] sm:$0xff]
  %v39 = vld [vmem:[%s0 + $0x8] sm:$0xff]
  %v40 = vld [vmem:[%s0 + $0x10] sm:$0xff]
  %v41 = vld [vmem:[%s0 + $0x18] sm:$0xff]
  %v42 = vld [vmem:[%s0 + $0x20] sm:$0xff]
  %v43 = vld [vmem:[%s0 + $0x28] sm:$0xff]
  %v44 = vld [vmem:[%s0 + $0x30] sm:$0xff]
  %v45 = vld [vmem:[%s0 + $0x38] sm:$0xff]
  %v46 = vld [vmem:[%s0 + $0x40] sm:$0xff]
  %v47 = vld [vmem:[%s0 + $0x48] sm:$0xff]
  %v48 = vld [vmem:[%s0 + $0x50] sm:$0xff]
  %v49 = vld [vmem:[%s0 + $0x58] sm:$0xff]
  %v50 = vld [vmem:[%s0 + $0x60] sm:$0xff]
  %v51 = vld [vmem:[%s0 + $0x68] sm:$0xff]
  %v52 = vld [vmem:[%s0 + $0x70] sm:$0xff]
  %v53 = vld [vmem:[%s0 + $0x78] sm:$0xff]
  %v54 = vld [vmem:[%s0 + $0x80] sm:$0xff]
  %v55 = vld [vmem:[%s0 + $0x88] sm:$0xff]
  %v56 = vld [vmem:[%s0 + $0x90] sm:$0xff]
  %v57 = vld [vmem:[%s0 + $0x98] sm:$0xff]
  %v58 = vld [vmem:[%s0 + $0xa0] sm:$0xff]
  %v59 = vld [vmem:[%s0 + $0xa8] sm:$0xff]
  %v60 = vld [vmem:[%s0 + $0xb0] sm:$0xff]
  %v61 = vld [vmem:[%s0 + $0xb8] sm:$0xff]
  %v62 = vld [vmem:[%s0 + $0xc0] sm:$0xff]
  %v63 = vld [vmem:[%s0 + $0xc8] sm:$0xff]
  %v64 = vld [vmem:[%s0 + $0xd0] sm:$0xff]
  %v65 = vld [vmem:[%s0 + $0xd8] sm:$0xff]
  %v66 = vld [vmem:[%s0 + $0xe0] sm:$0xff]
  %v67 = vld [vmem:[%s0 + $0xe8] sm:$0xff]
  %v68 = vld [vmem:[%s0 + $0xf0] sm:$0xff]
  %v69 = vld [vmem:[%s0 + $0xf8] sm:$0xff]
  %v70 = vld [vmem:[%s0 + $0x100] sm:$0xff]
  %v71 = vld [vmem:[%s0 + $0x108] sm:$0xff]
  %v72 = vld [vmem:[%s0 + $0x110] sm:$0xff]
  %v73 = vld [vmem:[%s0 + $0x118] sm:$0xff]
  %v74 = vld [vmem:[%s0 + $0x120] sm:$0x77]
  %v75 = vld [vmem:[%s0 + $0x128] sm:$0x77]
  %v78 = vunpack.c.l.b16 %v36
  %v79 = vunpack.c.h.b16 %v36
  %v80 = vunpack.c.l.b16 %v37
  %v81 = vunpack.c.h.b16 %v37
  %v82 = vpack.c.b16 %v80, %v78
  %v83 = vpack.c.b16 %v81, %v79
  %v123 = vunpack.c.l.b16 %v38
  %v124 = vunpack.c.h.b16 %v38
  %v125 = vunpack.c.l.b16 %v39
  %v126 = vunpack.c.h.b16 %v39
  %v127 = vunpack.c.l.b16 %v40
  %v128 = vunpack.c.h.b16 %v40
  %v129 = vunpack.c.l.b16 %v41
  %v130 = vunpack.c.h.b16 %v41
  %v131 = vunpack.c.l.b16 %v42
  %v132 = vunpack.c.h.b16 %v42
  %v133 = vunpack.c.l.b16 %v43
  %v134 = vunpack.c.h.b16 %v43
  %v135 = vunpack.c.l.b16 %v44
  %v136 = vunpack.c.h.b16 %v44
  %v137 = vunpack.c.l.b16 %v45
  %v138 = vunpack.c.h.b16 %v45
  %v139 = vunpack.c.l.b16 %v46
  %v140 = vunpack.c.h.b16 %v46
  %v141 = vunpack.c.l.b16 %v47
  %v142 = vunpack.c.h.b16 %v47
  %v143 = vunpack.c.l.b16 %v48
  %v144 = vunpack.c.h.b16 %v48
  %v145 = vunpack.c.l.b16 %v49
  %v146 = vunpack.c.h.b16 %v49
  %v147 = vunpack.c.l.b16 %v50
  %v148 = vunpack.c.h.b16 %v50
  %v149 = vunpack.c.l.b16 %v51
  %v150 = vunpack.c.h.b16 %v51
  %v151 = vunpack.c.l.b16 %v52
  %v152 = vunpack.c.h.b16 %v52
  %v153 = vunpack.c.l.b16 %v53
  %v154 = vunpack.c.h.b16 %v53
  %v155 = vunpack.c.l.b16 %v54
  %v156 = vunpack.c.h.b16 %v54
  %v157 = vunpack.c.l.b16 %v55
  %v158 = vunpack.c.h.b16 %v55
  %v159 = vunpack.c.l.b16 %v56
  %v160 = vunpack.c.h.b16 %v56
  %v161 = vunpack.c.l.b16 %v57
  %v162 = vunpack.c.h.b16 %v57
  %v163 = vunpack.c.l.b16 %v58
  %v164 = vunpack.c.h.b16 %v58
  %v165 = vunpack.c.l.b16 %v59
  %v166 = vunpack.c.h.b16 %v59
  %v167 = vunpack.c.l.b16 %v60
  %v168 = vunpack.c.h.b16 %v60
  %v169 = vunpack.c.l.b16 %v61
  %v170 = vunpack.c.h.b16 %v61
  %v171 = vunpack.c.l.b16 %v62
  %v172 = vunpack.c.h.b16 %v62
  %v173 = vunpack.c.l.b16 %v63
  %v174 = vunpack.c.h.b16 %v63
  %v175 = vunpack.c.l.b16 %v64
  %v176 = vunpack.c.h.b16 %v64
  %v177 = vunpack.c.l.b16 %v65
  %v178 = vunpack.c.h.b16 %v65
  %v179 = vunpack.c.l.b16 %v66
  %v180 = vunpack.c.h.b16 %v66
  %v181 = vunpack.c.l.b16 %v67
  %v182 = vunpack.c.h.b16 %v67
  %v183 = vunpack.c.l.b16 %v68
  %v184 = vunpack.c.h.b16 %v68
  %v185 = vunpack.c.l.b16 %v69
  %v186 = vunpack.c.h.b16 %v69
  %v187 = vunpack.c.l.b16 %v70
  %v188 = vunpack.c.h.b16 %v70
  %v189 = vunpack.c.l.b16 %v71
  %v190 = vunpack.c.h.b16 %v71
  %v191 = vunpack.c.l.b16 %v72
  %v192 = vunpack.c.h.b16 %v72
  %v193 = vunpack.c.l.b16 %v73
  %v194 = vunpack.c.h.b16 %v73
  %v195 = vunpack.c.l.b16 %v74
  %v196 = vunpack.c.h.b16 %v74
  %v197 = vunpack.c.l.b16 %v75
  %v198 = vunpack.c.h.b16 %v75
  %v199 = vpack.c.b16 %v127, %v123
  %v200 = vpack.c.b16 %v128, %v124
  %v201 = vpack.c.b16 %v129, %v125
  %v202 = vpack.c.b16 %v130, %v126
  %v203 = vpack.c.b16 %v135, %v131
  %v204 = vpack.c.b16 %v136, %v132
  %v205 = vpack.c.b16 %v137, %v133
  %v206 = vpack.c.b16 %v138, %v134
  %v207 = vpack.c.b16 %v143, %v139
  %v208 = vpack.c.b16 %v144, %v140
  %v209 = vpack.c.b16 %v145, %v141
  %v210 = vpack.c.b16 %v146, %v142
  %v211 = vpack.c.b16 %v151, %v147
  %v212 = vpack.c.b16 %v152, %v148
  %v213 = vpack.c.b16 %v153, %v149
  %v214 = vpack.c.b16 %v154, %v150
  %v215 = vpack.c.b16 %v159, %v155
  %v216 = vpack.c.b16 %v160, %v156
  %v217 = vpack.c.b16 %v161, %v157
  %v218 = vpack.c.b16 %v162, %v158
  %v219 = vpack.c.b16 %v167, %v163
  %v220 = vpack.c.b16 %v168, %v164
  %v221 = vpack.c.b16 %v169, %v165
  %v222 = vpack.c.b16 %v170, %v166
  %v223 = vpack.c.b16 %v175, %v171
  %v224 = vpack.c.b16 %v176, %v172
  %v225 = vpack.c.b16 %v177, %v173
  %v226 = vpack.c.b16 %v178, %v174
  %v227 = vpack.c.b16 %v183, %v179
  %v228 = vpack.c.b16 %v184, %v180
  %v229 = vpack.c.b16 %v185, %v181
  %v230 = vpack.c.b16 %v186, %v182
  %v231 = vpack.c.b16 %v191, %v187
  %v232 = vpack.c.b16 %v192, %v188
  %v233 = vpack.c.b16 %v193, %v189
  %v234 = vpack.c.b16 %v194, %v190
  %v235 = vpack.c.b16 %v195, %v195
  %v236 = vpack.c.b16 %v196, %v196
  %v237 = vpack.c.b16 %v197, %v197
  %v238 = vpack.c.b16 %v198, %v198
  %vm275 = vcmask 179200
  %v277 = vsel %vm275, %v83, 0
  %vm279 = vcmask 1042432
  %v281 = vsel %vm279, %v235, 0
  %v284 = vsel %vm279, %v236, 0
  %v287 = vsel %vm279, %v237, 0
  %v290 = vsel %vm279, %v238, 0
  %292 = vmatpush.bf16.msra.mxu0 %v227
  %293 = vmatpush.bf16.msra.mxu0 %v223
  %294 = vmatpush.bf16.msra.mxu0 %v219
  %295 = vmatpush.bf16.msra.mxu0 %v215
  %296 = vmatpush.bf16.msra.mxu0 %v211
  %297 = vmatpush.bf16.msra.mxu0 %v207
  %298 = vmatpush.bf16.msra.mxu0 %v203
  %299 = vmatpush.bf16.msra.mxu0 %v199
  %300 = vmatmul.bf16.gmra.mxu0 %v82
  %v301 = vpop.f32.mrf.mxu0
  %v302 = vadd.f32 0.0, %v301
  %v303 = vpop.f32.mrf.mxu0
  %v304 = vadd.f32 0.0, %v303
  %305 = vdwg.mxu0
  %306 = vmatpush.bf16.msra.mxu0 0
  %307 = vmatpush.bf16.msra.mxu0 0
  %308 = vmatpush.bf16.msra.mxu0 0
  %309 = vmatpush.bf16.msra.mxu0 0
  %310 = vmatpush.bf16.msra.mxu0 0
  %311 = vmatpush.bf16.msra.mxu0 0
  %312 = vmatpush.bf16.msra.mxu0 %v281
  %313 = vmatpush.bf16.msra.mxu0 %v231
  %314 = vmatmul.bf16.gmra.mxu0 %v277
  %v315 = vpop.f32.mrf.mxu0
  %v316 = vadd.f32 %v302, %v315
  %v317 = vpop.f32.mrf.mxu0
  %v318 = vadd.f32 %v304, %v317
  %319 = vdwg.mxu0
  %320 = vmatpush.bf16.msra.mxu0 %v228
  %321 = vmatpush.bf16.msra.mxu0 %v224
  %322 = vmatpush.bf16.msra.mxu0 %v220
  %323 = vmatpush.bf16.msra.mxu0 %v216
  %324 = vmatpush.bf16.msra.mxu0 %v212
  %325 = vmatpush.bf16.msra.mxu0 %v208
  %326 = vmatpush.bf16.msra.mxu0 %v204
  %327 = vmatpush.bf16.msra.mxu0 %v200
  %328 = vmatmul.bf16.gmra.mxu0 %v82
  %v329 = vpop.f32.mrf.mxu0
  %v330 = vadd.f32 0.0, %v329
  %v331 = vpop.f32.mrf.mxu0
  %v332 = vadd.f32 0.0, %v331
  %333 = vdwg.mxu0
  %334 = vmatpush.bf16.msra.mxu0 0
  %335 = vmatpush.bf16.msra.mxu0 0
  %336 = vmatpush.bf16.msra.mxu0 0
  %337 = vmatpush.bf16.msra.mxu0 0
  %338 = vmatpush.bf16.msra.mxu0 0
  %339 = vmatpush.bf16.msra.mxu0 0
  %340 = vmatpush.bf16.msra.mxu0 %v284
  %341 = vmatpush.bf16.msra.mxu0 %v232
  %342 = vmatmul.bf16.gmra.mxu0 %v277
  %v343 = vpop.f32.mrf.mxu0
  %v344 = vadd.f32 %v330, %v343
  %v345 = vpop.f32.mrf.mxu0
  %v346 = vadd.f32 %v332, %v345
  %347 = vdwg.mxu0
  %348 = vmatpush.bf16.msra.mxu0 %v229
  %349 = vmatpush.bf16.msra.mxu0 %v225
  %350 = vmatpush.bf16.msra.mxu0 %v221
  %351 = vmatpush.bf16.msra.mxu0 %v217
  %352 = vmatpush.bf16.msra.mxu0 %v213
  %353 = vmatpush.bf16.msra.mxu0 %v209
  %354 = vmatpush.bf16.msra.mxu0 %v205
  %355 = vmatpush.bf16.msra.mxu0 %v201
  %356 = vmatmul.bf16.gmra.mxu0 %v82
  %v357 = vpop.f32.mrf.mxu0
  %v358 = vadd.f32 0.0, %v357
  %v359 = vpop.f32.mrf.mxu0
  %v360 = vadd.f32 0.0, %v359
  %361 = vdwg.mxu0
  %362 = vmatpush.bf16.msra.mxu0 0
  %363 = vmatpush.bf16.msra.mxu0 0
  %364 = vmatpush.bf16.msra.mxu0 0
  %365 = vmatpush.bf16.msra.mxu0 0
  %366 = vmatpush.bf16.msra.mxu0 0
  %367 = vmatpush.bf16.msra.mxu0 0
  %368 = vmatpush.bf16.msra.mxu0 %v287
  %369 = vmatpush.bf16.msra.mxu0 %v233
  %370 = vmatmul.bf16.gmra.mxu0 %v277
  %v371 = vpop.f32.mrf.mxu0
  %v372 = vadd.f32 %v358, %v371
  %v373 = vpop.f32.mrf.mxu0
  %v374 = vadd.f32 %v360, %v373
  %375 = vdwg.mxu0
  %376 = vmatpush.bf16.msra.mxu0 %v230
  %377 = vmatpush.bf16.msra.mxu0 %v226
  %378 = vmatpush.bf16.msra.mxu0 %v222
  %379 = vmatpush.bf16.msra.mxu0 %v218
  %380 = vmatpush.bf16.msra.mxu0 %v214
  %381 = vmatpush.bf16.msra.mxu0 %v210
  %382 = vmatpush.bf16.msra.mxu0 %v206
  %383 = vmatpush.bf16.msra.mxu0 %v202
  %384 = vmatmul.bf16.gmra.mxu0 %v82
  %v385 = vpop.f32.mrf.mxu0
  %v386 = vadd.f32 0.0, %v385
  %v387 = vpop.f32.mrf.mxu0
  %v388 = vadd.f32 0.0, %v387
  %389 = vdwg.mxu0
  %390 = vmatpush.bf16.msra.mxu0 0
  %391 = vmatpush.bf16.msra.mxu0 0
  %392 = vmatpush.bf16.msra.mxu0 0
  %393 = vmatpush.bf16.msra.mxu0 0
  %394 = vmatpush.bf16.msra.mxu0 0
  %395 = vmatpush.bf16.msra.mxu0 0
  %396 = vmatpush.bf16.msra.mxu0 %v290
  %397 = vmatpush.bf16.msra.mxu0 %v234
  %398 = vmatmul.bf16.gmra.mxu0 %v277
  %v399 = vpop.f32.mrf.mxu0
  %v400 = vadd.f32 %v386, %v399
  %v401 = vpop.f32.mrf.mxu0
  %v402 = vadd.f32 %v388, %v401
  %403 = vdwg.mxu0
  %v404 = vmax.f32 %v316, %v344
  %v405 = vmax.f32 %v318, %v346
  %v406 = vmax.f32 %v372, %v400
  %v407 = vmax.f32 %v374, %v402
  %v408 = vmax.f32 %v404, %v406
  %v409 = vmax.f32 %v405, %v407
  %v410 = vld [vmem:[%s2] sm:$0xff]
  %v411 = vld [vmem:[%s2 + $0x8] sm:$0xff]
  %413 = vset.pattern.permute.xlu0 0
  %414 = vperm.xlu0 %413, %v410
  %v415 = vpop.permute.xlu0 %414
  %418 = vset.pattern.permute.xlu0 0
  %419 = vperm.xlu0 %418, %v411
  %v420 = vpop.permute.xlu0 %419
  %v422 = vadd.f32 %v408, %v415
  %v423 = vadd.f32 %v409, %v420
  %v424 = vmax.f32 %v422, 0.0
  %v425 = vmax.f32 %v423, 0.0
  %v426 = vpack.c.bf16 %v425, %v424
  %v427 = vld [vmem:[%s3] sm:$0xff]
  %v428 = vld [vmem:[%s3 + $0x8] sm:$0xff]
  %v429 = vld [vmem:[%s3 + $0x10] sm:$0xff]
  %v430 = vld [vmem:[%s3 + $0x18] sm:$0xff]
  %v431 = vld [vmem:[%s3 + $0x20] sm:$0xff]
  %v432 = vld [vmem:[%s3 + $0x28] sm:$0xff]
  %v433 = vld [vmem:[%s3 + $0x30] sm:$0xff]
  %v434 = vld [vmem:[%s3 + $0x38] sm:$0xff]
  %v435 = vld [vmem:[%s3 + $0x40] sm:$0xff]
  %v436 = vld [vmem:[%s3 + $0x48] sm:$0xff]
  %v437 = vld [vmem:[%s3 + $0x50] sm:$0xff]
  %v438 = vld [vmem:[%s3 + $0x58] sm:$0xff]
  %v439 = vld [vmem:[%s3 + $0x60] sm:$0xf]
  %v440 = vld [vmem:[%s3 + $0x64] sm:$0xff]
  %v441 = vld [vmem:[%s3 + $0x6c] sm:$0xff]
  %v442 = vld [vmem:[%s3 + $0x74] sm:$0xff]
  %v443 = vld [vmem:[%s3 + $0x7c] sm:$0xff]
  %v444 = vld [vmem:[%s3 + $0x84] sm:$0xff]
  %v445 = vld [vmem:[%s3 + $0x8c] sm:$0xff]
  %v446 = vld [vmem:[%s3 + $0x94] sm:$0xff]
  %v447 = vld [vmem:[%s3 + $0x9c] sm:$0xff]
  %v448 = vld [vmem:[%s3 + $0xa4] sm:$0xff]
  %v449 = vld [vmem:[%s3 + $0xac] sm:$0xff]
  %v450 = vld [vmem:[%s3 + $0xb4] sm:$0xff]
  %v451 = vld [vmem:[%s3 + $0xbc] sm:$0xff]
  %v452 = vld [vmem:[%s3 + $0xc4] sm:$0xf]
  %v453 = vld [vmem:[%s3 + $0xc8] sm:$0xff]
  %v454 = vld [vmem:[%s3 + $0xd0] sm:$0xff]
  %v455 = vld [vmem:[%s3 + $0xd8] sm:$0xff]
  %v456 = vld [vmem:[%s3 + $0xe0] sm:$0xff]
  %v457 = vld [vmem:[%s3 + $0xe8] sm:$0xff]
  %v458 = vld [vmem:[%s3 + $0xf0] sm:$0xff]
  %v459 = vld [vmem:[%s3 + $0xf8] sm:$0xff]
  %v460 = vld [vmem:[%s3 + $0x100] sm:$0xff]
  %v461 = vld [vmem:[%s3 + $0x108] sm:$0xff]
  %v462 = vld [vmem:[%s3 + $0x110] sm:$0xff]
  %v463 = vld [vmem:[%s3 + $0x118] sm:$0xff]
  %v464 = vld [vmem:[%s3 + $0x120] sm:$0xff]
  %v465 = vld [vmem:[%s3 + $0x128] sm:$0xf]
  %v466 = vld [vmem:[%s3 + $0x12c] sm:$0xff]
  %v467 = vld [vmem:[%s3 + $0x134] sm:$0xff]
  %v468 = vld [vmem:[%s3 + $0x13c] sm:$0xff]
  %v469 = vld [vmem:[%s3 + $0x144] sm:$0xff]
  %v470 = vld [vmem:[%s3 + $0x14c] sm:$0xff]
  %v471 = vld [vmem:[%s3 + $0x154] sm:$0xff]
  %v472 = vld [vmem:[%s3 + $0x15c] sm:$0xff]
  %v473 = vld [vmem:[%s3 + $0x164] sm:$0xff]
  %v474 = vld [vmem:[%s3 + $0x16c] sm:$0xff]
  %v475 = vld [vmem:[%s3 + $0x174] sm:$0xff]
  %v476 = vld [vmem:[%s3 + $0x17c] sm:$0xff]
  %v477 = vld [vmem:[%s3 + $0x184] sm:$0xff]
  %v478 = vld [vmem:[%s3 + $0x18c] sm:$0xf]
  %v479 = vld [vmem:[%s3 + $0x190] sm:$0xff]
  %v480 = vld [vmem:[%s3 + $0x198] sm:$0xff]
  %v481 = vld [vmem:[%s3 + $0x1a0] sm:$0xff]
  %v482 = vld [vmem:[%s3 + $0x1a8] sm:$0xff]
  %v483 = vld [vmem:[%s3 + $0x1b0] sm:$0xff]
  %v484 = vld [vmem:[%s3 + $0x1b8] sm:$0xff]
  %v485 = vld [vmem:[%s3 + $0x1c0] sm:$0xff]
  %v486 = vld [vmem:[%s3 + $0x1c8] sm:$0xff]
  %v487 = vld [vmem:[%s3 + $0x1d0] sm:$0xff]
  %v488 = vld [vmem:[%s3 + $0x1d8] sm:$0xff]
  %v489 = vld [vmem:[%s3 + $0x1e0] sm:$0xff]
  %v490 = vld [vmem:[%s3 + $0x1e8] sm:$0xff]
  %v491 = vld [vmem:[%s3 + $0x1f0] sm:$0xf]
  %v492 = vld [vmem:[%s3 + $0x1f4] sm:$0xff]
  %v493 = vld [vmem:[%s3 + $0x1fc] sm:$0xff]
  %v494 = vld [vmem:[%s3 + $0x204] sm:$0xff]
  %v495 = vld [vmem:[%s3 + $0x20c] sm:$0xff]
  %v496 = vld [vmem:[%s3 + $0x214] sm:$0xff]
  %v497 = vld [vmem:[%s3 + $0x21c] sm:$0xff]
  %v498 = vld [vmem:[%s3 + $0x224] sm:$0xff]
  %v499 = vld [vmem:[%s3 + $0x22c] sm:$0xff]
  %v500 = vld [vmem:[%s3 + $0x234] sm:$0xff]
  %v501 = vld [vmem:[%s3 + $0x23c] sm:$0xff]
  %v502 = vld [vmem:[%s3 + $0x244] sm:$0xff]
  %v503 = vld [vmem:[%s3 + $0x24c] sm:$0xff]
  %v504 = vld [vmem:[%s3 + $0x254] sm:$0xf]
  %v505 = vld [vmem:[%s3 + $0x258] sm:$0xff]
  %v506 = vld [vmem:[%s3 + $0x260] sm:$0xff]
  %v507 = vld [vmem:[%s3 + $0x268] sm:$0xff]
  %v508 = vld [vmem:[%s3 + $0x270] sm:$0xff]
  %v509 = vld [vmem:[%s3 + $0x278] sm:$0xff]
  %v510 = vld [vmem:[%s3 + $0x280] sm:$0xff]
  %v511 = vld [vmem:[%s3 + $0x288] sm:$0xff]
  %v512 = vld [vmem:[%s3 + $0x290] sm:$0xff]
  %v513 = vld [vmem:[%s3 + $0x298] sm:$0xff]
  %v514 = vld [vmem:[%s3 + $0x2a0] sm:$0xff]
  %v515 = vld [vmem:[%s3 + $0x2a8] sm:$0xff]
  %v516 = vld [vmem:[%s3 + $0x2b0] sm:$0xff]
  %v517 = vld [vmem:[%s3 + $0x2b8] sm:$0xf]
  %v518 = vld [vmem:[%s3 + $0x2bc] sm:$0xff]
  %v519 = vld [vmem:[%s3 + $0x2c4] sm:$0xff]
  %v520 = vld [vmem:[%s3 + $0x2cc] sm:$0xff]
  %v521 = vld [vmem:[%s3 + $0x2d4] sm:$0xff]
  %v522 = vld [vmem:[%s3 + $0x2dc] sm:$0xff]
  %v523 = vld [vmem:[%s3 + $0x2e4] sm:$0xff]
  %v524 = vld [vmem:[%s3 + $0x2ec] sm:$0xff]
  %v525 = vld [vmem:[%s3 + $0x2f4] sm:$0xff]
  %v526 = vld [vmem:[%s3 + $0x2fc] sm:$0xff]
  %v527 = vld [vmem:[%s3 + $0x304] sm:$0xff]
  %v528 = vld [vmem:[%s3 + $0x30c] sm:$0xff]
  %v529 = vld [vmem:[%s3 + $0x314] sm:$0xff]
  %v530 = vld [vmem:[%s3 + $0x31c] sm:$0xf]
  %v531 = vld [vmem:[%s3 + $0x320] sm:$0xff]
  %v532 = vld [vmem:[%s3 + $0x328] sm:$0xff]
  %v533 = vld [vmem:[%s3 + $0x330] sm:$0xff]
  %v534 = vld [vmem:[%s3 + $0x338] sm:$0xff]
  %v535 = vld [vmem:[%s3 + $0x340] sm:$0xff]
  %v536 = vld [vmem:[%s3 + $0x348] sm:$0xff]
  %v537 = vld [vmem:[%s3 + $0x350] sm:$0xff]
  %v538 = vld [vmem:[%s3 + $0x358] sm:$0xff]
  %v539 = vld [vmem:[%s3 + $0x360] sm:$0xff]
  %v540 = vld [vmem:[%s3 + $0x368] sm:$0xff]
  %v541 = vld [vmem:[%s3 + $0x370] sm:$0xff]
  %v542 = vld [vmem:[%s3 + $0x378] sm:$0xff]
  %v543 = vld [vmem:[%s3 + $0x380] sm:$0xf]
  %v544 = vld [vmem:[%s3 + $0x384] sm:$0xff]
  %v545 = vld [vmem:[%s3 + $0x38c] sm:$0xff]
  %v546 = vld [vmem:[%s3 + $0x394] sm:$0xff]
  %v547 = vld [vmem:[%s3 + $0x39c] sm:$0xff]
  %v548 = vld [vmem:[%s3 + $0x3a4] sm:$0xff]
  %v549 = vld [vmem:[%s3 + $0x3ac] sm:$0xff]
  %v550 = vld [vmem:[%s3 + $0x3b4] sm:$0xff]
  %v551 = vld [vmem:[%s3 + $0x3bc] sm:$0xff]
  %v552 = vld [vmem:[%s3 + $0x3c4] sm:$0xff]
  %v553 = vld [vmem:[%s3 + $0x3cc] sm:$0xff]
  %v554 = vld [vmem:[%s3 + $0x3d4] sm:$0xff]
  %v555 = vld [vmem:[%s3 + $0x3dc] sm:$0xff]
  %v556 = vld [vmem:[%s3 + $0x3e4] sm:$0xf]
  %v557 = vld [vmem:[%s3 + $0x3e8] sm:$0xff]
  %v558 = vld [vmem:[%s3 + $0x3f0] sm:$0xff]
  %v559 = vld [vmem:[%s3 + $0x3f8] sm:$0xff]
  %v560 = vld [vmem:[%s3 + $0x400] sm:$0xff]
  %v561 = vld [vmem:[%s3 + $0x408] sm:$0xff]
  %v562 = vld [vmem:[%s3 + $0x410] sm:$0xff]
  %v563 = vld [vmem:[%s3 + $0x418] sm:$0xff]
  %v564 = vld [vmem:[%s3 + $0x420] sm:$0xff]
  %v565 = vld [vmem:[%s3 + $0x428] sm:$0xff]
  %v566 = vld [vmem:[%s3 + $0x430] sm:$0xff]
  %v567 = vld [vmem:[%s3 + $0x438] sm:$0xff]
  %v568 = vld [vmem:[%s3 + $0x440] sm:$0xff]
  %v569 = vld [vmem:[%s3 + $0x448] sm:$0xf]
  %v570 = vld [vmem:[%s3 + $0x44c] sm:$0xff]
  %v571 = vld [vmem:[%s3 + $0x454] sm:$0xff]
  %v572 = vld [vmem:[%s3 + $0x45c] sm:$0xff]
  %v573 = vld [vmem:[%s3 + $0x464] sm:$0xff]
  %v574 = vld [vmem:[%s3 + $0x46c] sm:$0xff]
  %v575 = vld [vmem:[%s3 + $0x474] sm:$0xff]
  %v576 = vld [vmem:[%s3 + $0x47c] sm:$0xff]
  %v577 = vld [vmem:[%s3 + $0x484] sm:$0xff]
  %v578 = vld [vmem:[%s3 + $0x48c] sm:$0xff]
  %v579 = vld [vmem:[%s3 + $0x494] sm:$0xff]
  %v580 = vld [vmem:[%s3 + $0x49c] sm:$0xff]
  %v581 = vld [vmem:[%s3 + $0x4a4] sm:$0xff]
  %v582 = vld [vmem:[%s3 + $0x4ac] sm:$0xf]
  %v583 = vld [vmem:[%s3 + $0x4b0] sm:$0xff]
  %v584 = vld [vmem:[%s3 + $0x4b8] sm:$0xff]
  %v585 = vld [vmem:[%s3 + $0x4c0] sm:$0xff]
  %v586 = vld [vmem:[%s3 + $0x4c8] sm:$0xff]
  %v587 = vld [vmem:[%s3 + $0x4d0] sm:$0xff]
  %v588 = vld [vmem:[%s3 + $0x4d8] sm:$0xff]
  %v589 = vld [vmem:[%s3 + $0x4e0] sm:$0xff]
  %v590 = vld [vmem:[%s3 + $0x4e8] sm:$0xff]
  %v591 = vld [vmem:[%s3 + $0x4f0] sm:$0xff]
  %v592 = vld [vmem:[%s3 + $0x4f8] sm:$0xff]
  %v593 = vld [vmem:[%s3 + $0x500] sm:$0xff]
  %v594 = vld [vmem:[%s3 + $0x508] sm:$0xff]
  %v595 = vld [vmem:[%s3 + $0x510] sm:$0xf]
  %v596 = vld [vmem:[%s3 + $0x514] sm:$0xff]
  %v597 = vld [vmem:[%s3 + $0x51c] sm:$0xff]
  %v598 = vld [vmem:[%s3 + $0x524] sm:$0xff]
  %v599 = vld [vmem:[%s3 + $0x52c] sm:$0xff]
  %v600 = vld [vmem:[%s3 + $0x534] sm:$0xff]
  %v601 = vld [vmem:[%s3 + $0x53c] sm:$0xff]
  %v602 = vld [vmem:[%s3 + $0x544] sm:$0xff]
  %v603 = vld [vmem:[%s3 + $0x54c] sm:$0xff]
  %v604 = vld [vmem:[%s3 + $0x554] sm:$0xff]
  %v605 = vld [vmem:[%s3 + $0x55c] sm:$0xff]
  %v606 = vld [vmem:[%s3 + $0x564] sm:$0xff]
  %v607 = vld [vmem:[%s3 + $0x56c] sm:$0xff]
  %v608 = vld [vmem:[%s3 + $0x574] sm:$0xf]
  %v609 = vld [vmem:[%s3 + $0x578] sm:$0xff]
  %v610 = vld [vmem:[%s3 + $0x580] sm:$0xff]
  %v611 = vld [vmem:[%s3 + $0x588] sm:$0xff]
  %v612 = vld [vmem:[%s3 + $0x590] sm:$0xff]
  %v613 = vld [vmem:[%s3 + $0x598] sm:$0xff]
  %v614 = vld [vmem:[%s3 + $0x5a0] sm:$0xff]
  %v615 = vld [vmem:[%s3 + $0x5a8] sm:$0xff]
  %v616 = vld [vmem:[%s3 + $0x5b0] sm:$0xff]
  %v617 = vld [vmem:[%s3 + $0x5b8] sm:$0xff]
  %v618 = vld [vmem:[%s3 + $0x5c0] sm:$0xff]
  %v619 = vld [vmem:[%s3 + $0x5c8] sm:$0xff]
  %v620 = vld [vmem:[%s3 + $0x5d0] sm:$0xff]
  %v621 = vld [vmem:[%s3 + $0x5d8] sm:$0xf]
  %v622 = vld [vmem:[%s3 + $0x5dc] sm:$0xff]
  %v623 = vld [vmem:[%s3 + $0x5e4] sm:$0xff]
  %v624 = vld [vmem:[%s3 + $0x5ec] sm:$0xff]
  %v625 = vld [vmem:[%s3 + $0x5f4] sm:$0xff]
  %v626 = vld [vmem:[%s3 + $0x5fc] sm:$0xff]
  %v627 = vld [vmem:[%s3 + $0x604] sm:$0xff]
  %v628 = vld [vmem:[%s3 + $0x60c] sm:$0xff]
  %v629 = vld [vmem:[%s3 + $0x614] sm:$0xff]
  %v630 = vld [vmem:[%s3 + $0x61c] sm:$0xff]
  %v631 = vld [vmem:[%s3 + $0x624] sm:$0xff]
  %v632 = vld [vmem:[%s3 + $0x62c] sm:$0xff]
  %v633 = vld [vmem:[%s3 + $0x634] sm:$0xff]
  %v634 = vld [vmem:[%s3 + $0x63c] sm:$0xf]
  %v843 = vunpack.c.l.b16 %v427
  %v844 = vunpack.c.h.b16 %v427
  %v845 = vunpack.c.l.b16 %v428
  %v846 = vunpack.c.h.b16 %v428
  %v847 = vunpack.c.l.b16 %v429
  %v848 = vunpack.c.h.b16 %v429
  %v849 = vunpack.c.l.b16 %v430
  %v850 = vunpack.c.h.b16 %v430
  %v851 = vunpack.c.l.b16 %v431
  %v852 = vunpack.c.h.b16 %v431
  %v853 = vunpack.c.l.b16 %v432
  %v854 = vunpack.c.h.b16 %v432
  %v855 = vunpack.c.l.b16 %v433
  %v856 = vunpack.c.h.b16 %v433
  %v857 = vunpack.c.l.b16 %v434
  %v858 = vunpack.c.h.b16 %v434
  %v859 = vunpack.c.l.b16 %v435
  %v860 = vunpack.c.h.b16 %v435
  %v861 = vunpack.c.l.b16 %v436
  %v862 = vunpack.c.h.b16 %v436
  %v863 = vunpack.c.l.b16 %v437
  %v864 = vunpack.c.h.b16 %v437
  %v865 = vunpack.c.l.b16 %v438
  %v866 = vunpack.c.h.b16 %v438
  %v867 = vunpack.c.l.b16 %v439
  %v868 = vunpack.c.l.b16 %v440
  %v869 = vunpack.c.h.b16 %v440
  %v870 = vunpack.c.l.b16 %v441
  %v871 = vunpack.c.h.b16 %v441
  %v872 = vunpack.c.l.b16 %v442
  %v873 = vunpack.c.h.b16 %v442
  %v874 = vunpack.c.l.b16 %v443
  %v875 = vunpack.c.h.b16 %v443
  %v876 = vunpack.c.l.b16 %v444
  %v877 = vunpack.c.h.b16 %v444
  %v878 = vunpack.c.l.b16 %v445
  %v879 = vunpack.c.h.b16 %v445
  %v880 = vunpack.c.l.b16 %v446
  %v881 = vunpack.c.h.b16 %v446
  %v882 = vunpack.c.l.b16 %v447
  %v883 = vunpack.c.h.b16 %v447
  %v884 = vunpack.c.l.b16 %v448
  %v885 = vunpack.c.h.b16 %v448
  %v886 = vunpack.c.l.b16 %v449
  %v887 = vunpack.c.h.b16 %v449
  %v888 = vunpack.c.l.b16 %v450
  %v889 = vunpack.c.h.b16 %v450
  %v890 = vunpack.c.l.b16 %v451
  %v891 = vunpack.c.h.b16 %v451
  %v892 = vunpack.c.l.b16 %v452
  %v893 = vunpack.c.l.b16 %v453
  %v894 = vunpack.c.h.b16 %v453
  %v895 = vunpack.c.l.b16 %v454
  %v896 = vunpack.c.h.b16 %v454
  %v897 = vunpack.c.l.b16 %v455
  %v898 = vunpack.c.h.b16 %v455
  %v899 = vunpack.c.l.b16 %v456
  %v900 = vunpack.c.h.b16 %v456
  %v901 = vunpack.c.l.b16 %v457
  %v902 = vunpack.c.h.b16 %v457
  %v903 = vunpack.c.l.b16 %v458
  %v904 = vunpack.c.h.b16 %v458
  %v905 = vunpack.c.l.b16 %v459
  %v906 = vunpack.c.h.b16 %v459
  %v907 = vunpack.c.l.b16 %v460
  %v908 = vunpack.c.h.b16 %v460
  %v909 = vunpack.c.l.b16 %v461
  %v910 = vunpack.c.h.b16 %v461
  %v911 = vunpack.c.l.b16 %v462
  %v912 = vunpack.c.h.b16 %v462
  %v913 = vunpack.c.l.b16 %v463
  %v914 = vunpack.c.h.b16 %v463
  %v915 = vunpack.c.l.b16 %v464
  %v916 = vunpack.c.h.b16 %v464
  %v917 = vunpack.c.l.b16 %v465
  %v918 = vunpack.c.l.b16 %v466
  %v919 = vunpack.c.h.b16 %v466
  %v920 = vunpack.c.l.b16 %v467
  %v921 = vunpack.c.h.b16 %v467
  %v922 = vunpack.c.l.b16 %v468
  %v923 = vunpack.c.h.b16 %v468
  %v924 = vunpack.c.l.b16 %v469
  %v925 = vunpack.c.h.b16 %v469
  %v926 = vunpack.c.l.b16 %v470
  %v927 = vunpack.c.h.b16 %v470
  %v928 = vunpack.c.l.b16 %v471
  %v929 = vunpack.c.h.b16 %v471
  %v930 = vunpack.c.l.b16 %v472
  %v931 = vunpack.c.h.b16 %v472
  %v932 = vunpack.c.l.b16 %v473
  %v933 = vunpack.c.h.b16 %v473
  %v934 = vunpack.c.l.b16 %v474
  %v935 = vunpack.c.h.b16 %v474
  %v936 = vunpack.c.l.b16 %v475
  %v937 = vunpack.c.h.b16 %v475
  %v938 = vunpack.c.l.b16 %v476
  %v939 = vunpack.c.h.b16 %v476
  %v940 = vunpack.c.l.b16 %v477
  %v941 = vunpack.c.h.b16 %v477
  %v942 = vunpack.c.l.b16 %v478
  %v943 = vunpack.c.l.b16 %v479
  %v944 = vunpack.c.h.b16 %v479
  %v945 = vunpack.c.l.b16 %v480
  %v946 = vunpack.c.h.b16 %v480
  %v947 = vunpack.c.l.b16 %v481
  %v948 = vunpack.c.h.b16 %v481
  %v949 = vunpack.c.l.b16 %v482
  %v950 = vunpack.c.h.b16 %v482
  %v951 = vunpack.c.l.b16 %v483
  %v952 = vunpack.c.h.b16 %v483
  %v953 = vunpack.c.l.b16 %v484
  %v954 = vunpack.c.h.b16 %v484
  %v955 = vunpack.c.l.b16 %v485
  %v956 = vunpack.c.h.b16 %v485
  %v957 = vunpack.c.l.b16 %v486
  %v958 = vunpack.c.h.b16 %v486
  %v959 = vunpack.c.l.b16 %v487
  %v960 = vunpack.c.h.b16 %v487
  %v961 = vunpack.c.l.b16 %v488
  %v962 = vunpack.c.h.b16 %v488
  %v963 = vunpack.c.l.b16 %v489
  %v964 = vunpack.c.h.b16 %v489
  %v965 = vunpack.c.l.b16 %v490
  %v966 = vunpack.c.h.b16 %v490
  %v967 = vunpack.c.l.b16 %v491
  %v968 = vunpack.c.l.b16 %v492
  %v969 = vunpack.c.h.b16 %v492
  %v970 = vunpack.c.l.b16 %v493
  %v971 = vunpack.c.h.b16 %v493
  %v972 = vunpack.c.l.b16 %v494
  %v973 = vunpack.c.h.b16 %v494
  %v974 = vunpack.c.l.b16 %v495
  %v975 = vunpack.c.h.b16 %v495
  %v976 = vunpack.c.l.b16 %v496
  %v977 = vunpack.c.h.b16 %v496
  %v978 = vunpack.c.l.b16 %v497
  %v979 = vunpack.c.h.b16 %v497
  %v980 = vunpack.c.l.b16 %v498
  %v981 = vunpack.c.h.b16 %v498
  %v982 = vunpack.c.l.b16 %v499
  %v983 = vunpack.c.h.b16 %v499
  %v984 = vunpack.c.l.b16 %v500
  %v985 = vunpack.c.h.b16 %v500
  %v986 = vunpack.c.l.b16 %v501
  %v987 = vunpack.c.h.b16 %v501
  %v988 = vunpack.c.l.b16 %v502
  %v989 = vunpack.c.h.b16 %v502
  %v990 = vunpack.c.l.b16 %v503
  %v991 = vunpack.c.h.b16 %v503
  %v992 = vunpack.c.l.b16 %v504
  %v993 = vunpack.c.l.b16 %v505
  %v994 = vunpack.c.h.b16 %v505
  %v995 = vunpack.c.l.b16 %v506
  %v996 = vunpack.c.h.b16 %v506
  %v997 = vunpack.c.l.b16 %v507
  %v998 = vunpack.c.h.b16 %v507
  %v999 = vunpack.c.l.b16 %v508
  %v1000 = vunpack.c.h.b16 %v508
  %v1001 = vunpack.c.l.b16 %v509
  %v1002 = vunpack.c.h.b16 %v509
  %v1003 = vunpack.c.l.b16 %v510
  %v1004 = vunpack.c.h.b16 %v510
  %v1005 = vunpack.c.l.b16 %v511
  %v1006 = vunpack.c.h.b16 %v511
  %v1007 = vunpack.c.l.b16 %v512
  %v1008 = vunpack.c.h.b16 %v512
  %v1009 = vunpack.c.l.b16 %v513
  %v1010 = vunpack.c.h.b16 %v513
  %v1011 = vunpack.c.l.b16 %v514
  %v1012 = vunpack.c.h.b16 %v514
  %v1013 = vunpack.c.l.b16 %v515
  %v1014 = vunpack.c.h.b16 %v515
  %v1015 = vunpack.c.l.b16 %v516
  %v1016 = vunpack.c.h.b16 %v516
  %v1017 = vunpack.c.l.b16 %v517
  %v1018 = vunpack.c.l.b16 %v518
  %v1019 = vunpack.c.h.b16 %v518
  %v1020 = vunpack.c.l.b16 %v519
  %v1021 = vunpack.c.h.b16 %v519
  %v1022 = vunpack.c.l.b16 %v520
  %v1023 = vunpack.c.h.b16 %v520
  %v1024 = vunpack.c.l.b16 %v521
  %v1025 = vunpack.c.h.b16 %v521
  %v1026 = vunpack.c.l.b16 %v522
  %v1027 = vunpack.c.h.b16 %v522
  %v1028 = vunpack.c.l.b16 %v523
  %v1029 = vunpack.c.h.b16 %v523
  %v1030 = vunpack.c.l.b16 %v524
  %v1031 = vunpack.c.h.b16 %v524
  %v1032 = vunpack.c.l.b16 %v525
  %v1033 = vunpack.c.h.b16 %v525
  %v1034 = vunpack.c.l.b16 %v526
  %v1035 = vunpack.c.h.b16 %v526
  %v1036 = vunpack.c.l.b16 %v527
  %v1037 = vunpack.c.h.b16 %v527
  %v1038 = vunpack.c.l.b16 %v528
  %v1039 = vunpack.c.h.b16 %v528
  %v1040 = vunpack.c.l.b16 %v529
  %v1041 = vunpack.c.h.b16 %v529
  %v1042 = vunpack.c.l.b16 %v530
  %v1043 = vunpack.c.l.b16 %v531
  %v1044 = vunpack.c.h.b16 %v531
  %v1045 = vunpack.c.l.b16 %v532
  %v1046 = vunpack.c.h.b16 %v532
  %v1047 = vunpack.c.l.b16 %v533
  %v1048 = vunpack.c.h.b16 %v533
  %v1049 = vunpack.c.l.b16 %v534
  %v1050 = vunpack.c.h.b16 %v534
  %v1051 = vunpack.c.l.b16 %v535
  %v1052 = vunpack.c.h.b16 %v535
  %v1053 = vunpack.c.l.b16 %v536
  %v1054 = vunpack.c.h.b16 %v536
  %v1055 = vunpack.c.l.b16 %v537
  %v1056 = vunpack.c.h.b16 %v537
  %v1057 = vunpack.c.l.b16 %v538
  %v1058 = vunpack.c.h.b16 %v538
  %v1059 = vunpack.c.l.b16 %v539
  %v1060 = vunpack.c.h.b16 %v539
  %v1061 = vunpack.c.l.b16 %v540
  %v1062 = vunpack.c.h.b16 %v540
  %v1063 = vunpack.c.l.b16 %v541
  %v1064 = vunpack.c.h.b16 %v541
  %v1065 = vunpack.c.l.b16 %v542
  %v1066 = vunpack.c.h.b16 %v542
  %v1067 = vunpack.c.l.b16 %v543
  %v1068 = vunpack.c.l.b16 %v544
  %v1069 = vunpack.c.h.b16 %v544
  %v1070 = vunpack.c.l.b16 %v545
  %v1071 = vunpack.c.h.b16 %v545
  %v1072 = vunpack.c.l.b16 %v546
  %v1073 = vunpack.c.h.b16 %v546
  %v1074 = vunpack.c.l.b16 %v547
  %v1075 = vunpack.c.h.b16 %v547
  %v1076 = vunpack.c.l.b16 %v548
  %v1077 = vunpack.c.h.b16 %v548
  %v1078 = vunpack.c.l.b16 %v549
  %v1079 = vunpack.c.h.b16 %v549
  %v1080 = vunpack.c.l.b16 %v550
  %v1081 = vunpack.c.h.b16 %v550
  %v1082 = vunpack.c.l.b16 %v551
  %v1083 = vunpack.c.h.b16 %v551
  %v1084 = vunpack.c.l.b16 %v552
  %v1085 = vunpack.c.h.b16 %v552
  %v1086 = vunpack.c.l.b16 %v553
  %v1087 = vunpack.c.h.b16 %v553
  %v1088 = vunpack.c.l.b16 %v554
  %v1089 = vunpack.c.h.b16 %v554
  %v1090 = vunpack.c.l.b16 %v555
  %v1091 = vunpack.c.h.b16 %v555
  %v1092 = vunpack.c.l.b16 %v556
  %v1093 = vunpack.c.l.b16 %v557
  %v1094 = vunpack.c.h.b16 %v557
  %v1095 = vunpack.c.l.b16 %v558
  %v1096 = vunpack.c.h.b16 %v558
  %v1097 = vunpack.c.l.b16 %v559
  %v1098 = vunpack.c.h.b16 %v559
  %v1099 = vunpack.c.l.b16 %v560
  %v1100 = vunpack.c.h.b16 %v560
  %v1101 = vunpack.c.l.b16 %v561
  %v1102 = vunpack.c.h.b16 %v561
  %v1103 = vunpack.c.l.b16 %v562
  %v1104 = vunpack.c.h.b16 %v562
  %v1105 = vunpack.c.l.b16 %v563
  %v1106 = vunpack.c.h.b16 %v563
  %v1107 = vunpack.c.l.b16 %v564
  %v1108 = vunpack.c.h.b16 %v564
  %v1109 = vunpack.c.l.b16 %v565
  %v1110 = vunpack.c.h.b16 %v565
  %v1111 = vunpack.c.l.b16 %v566
  %v1112 = vunpack.c.h.b16 %v566
  %v1113 = vunpack.c.l.b16 %v567
  %v1114 = vunpack.c.h.b16 %v567
  %v1115 = vunpack.c.l.b16 %v568
  %v1116 = vunpack.c.h.b16 %v568
  %v1117 = vunpack.c.l.b16 %v569
  %v1118 = vunpack.c.l.b16 %v570
  %v1119 = vunpack.c.h.b16 %v570
  %v1120 = vunpack.c.l.b16 %v571
  %v1121 = vunpack.c.h.b16 %v571
  %v1122 = vunpack.c.l.b16 %v572
  %v1123 = vunpack.c.h.b16 %v572
  %v1124 = vunpack.c.l.b16 %v573
  %v1125 = vunpack.c.h.b16 %v573
  %v1126 = vunpack.c.l.b16 %v574
  %v1127 = vunpack.c.h.b16 %v574
  %v1128 = vunpack.c.l.b16 %v575
  %v1129 = vunpack.c.h.b16 %v575
  %v1130 = vunpack.c.l.b16 %v576
  %v1131 = vunpack.c.h.b16 %v576
  %v1132 = vunpack.c.l.b16 %v577
  %v1133 = vunpack.c.h.b16 %v577
  %v1134 = vunpack.c.l.b16 %v578
  %v1135 = vunpack.c.h.b16 %v578
  %v1136 = vunpack.c.l.b16 %v579
  %v1137 = vunpack.c.h.b16 %v579
  %v1138 = vunpack.c.l.b16 %v580
  %v1139 = vunpack.c.h.b16 %v580
  %v1140 = vunpack.c.l.b16 %v581
  %v1141 = vunpack.c.h.b16 %v581
  %v1142 = vunpack.c.l.b16 %v582
  %v1143 = vunpack.c.l.b16 %v583
  %v1144 = vunpack.c.h.b16 %v583
  %v1145 = vunpack.c.l.b16 %v584
  %v1146 = vunpack.c.h.b16 %v584
  %v1147 = vunpack.c.l.b16 %v585
  %v1148 = vunpack.c.h.b16 %v585
  %v1149 = vunpack.c.l.b16 %v586
  %v1150 = vunpack.c.h.b16 %v586
  %v1151 = vunpack.c.l.b16 %v587
  %v1152 = vunpack.c.h.b16 %v587
  %v1153 = vunpack.c.l.b16 %v588
  %v1154 = vunpack.c.h.b16 %v588
  %v1155 = vunpack.c.l.b16 %v589
  %v1156 = vunpack.c.h.b16 %v589
  %v1157 = vunpack.c.l.b16 %v590
  %v1158 = vunpack.c.h.b16 %v590
  %v1159 = vunpack.c.l.b16 %v591
  %v1160 = vunpack.c.h.b16 %v591
  %v1161 = vunpack.c.l.b16 %v592
  %v1162 = vunpack.c.h.b16 %v592
  %v1163 = vunpack.c.l.b16 %v593
  %v1164 = vunpack.c.h.b16 %v593
  %v1165 = vunpack.c.l.b16 %v594
  %v1166 = vunpack.c.h.b16 %v594
  %v1167 = vunpack.c.l.b16 %v595
  %v1168 = vunpack.c.l.b16 %v596
  %v1169 = vunpack.c.h.b16 %v596
  %v1170 = vunpack.c.l.b16 %v597
  %v1171 = vunpack.c.h.b16 %v597
  %v1172 = vunpack.c.l.b16 %v598
  %v1173 = vunpack.c.h.b16 %v598
  %v1174 = vunpack.c.l.b16 %v599
  %v1175 = vunpack.c.h.b16 %v599
  %v1176 = vunpack.c.l.b16 %v600
  %v1177 = vunpack.c.h.b16 %v600
  %v1178 = vunpack.c.l.b16 %v601
  %v1179 = vunpack.c.h.b16 %v601
  %v1180 = vunpack.c.l.b16 %v602
  %v1181 = vunpack.c.h.b16 %v602
  %v1182 = vunpack.c.l.b16 %v603
  %v1183 = vunpack.c.h.b16 %v603
  %v1184 = vunpack.c.l.b16 %v604
  %v1185 = vunpack.c.h.b16 %v604
  %v1186 = vunpack.c.l.b16 %v605
  %v1187 = vunpack.c.h.b16 %v605
  %v1188 = vunpack.c.l.b16 %v606
  %v1189 = vunpack.c.h.b16 %v606
  %v1190 = vunpack.c.l.b16 %v607
  %v1191 = vunpack.c.h.b16 %v607
  %v1192 = vunpack.c.l.b16 %v608
  %v1193 = vunpack.c.l.b16 %v609
  %v1194 = vunpack.c.h.b16 %v609
  %v1195 = vunpack.c.l.b16 %v610
  %v1196 = vunpack.c.h.b16 %v610
  %v1197 = vunpack.c.l.b16 %v611
  %v1198 = vunpack.c.h.b16 %v611
  %v1199 = vunpack.c.l.b16 %v612
  %v1200 = vunpack.c.h.b16 %v612
  %v1201 = vunpack.c.l.b16 %v613
  %v1202 = vunpack.c.h.b16 %v613
  %v1203 = vunpack.c.l.b16 %v614
  %v1204 = vunpack.c.h.b16 %v614
  %v1205 = vunpack.c.l.b16 %v615
  %v1206 = vunpack.c.h.b16 %v615
  %v1207 = vunpack.c.l.b16 %v616
  %v1208 = vunpack.c.h.b16 %v616
  %v1209 = vunpack.c.l.b16 %v617
  %v1210 = vunpack.c.h.b16 %v617
  %v1211 = vunpack.c.l.b16 %v618
  %v1212 = vunpack.c.h.b16 %v618
  %v1213 = vunpack.c.l.b16 %v619
  %v1214 = vunpack.c.h.b16 %v619
  %v1215 = vunpack.c.l.b16 %v620
  %v1216 = vunpack.c.h.b16 %v620
  %v1217 = vunpack.c.l.b16 %v621
  %v1218 = vunpack.c.l.b16 %v622
  %v1219 = vunpack.c.h.b16 %v622
  %v1220 = vunpack.c.l.b16 %v623
  %v1221 = vunpack.c.h.b16 %v623
  %v1222 = vunpack.c.l.b16 %v624
  %v1223 = vunpack.c.h.b16 %v624
  %v1224 = vunpack.c.l.b16 %v625
  %v1225 = vunpack.c.h.b16 %v625
  %v1226 = vunpack.c.l.b16 %v626
  %v1227 = vunpack.c.h.b16 %v626
  %v1228 = vunpack.c.l.b16 %v627
  %v1229 = vunpack.c.h.b16 %v627
  %v1230 = vunpack.c.l.b16 %v628
  %v1231 = vunpack.c.h.b16 %v628
  %v1232 = vunpack.c.l.b16 %v629
  %v1233 = vunpack.c.h.b16 %v629
  %v1234 = vunpack.c.l.b16 %v630
  %v1235 = vunpack.c.h.b16 %v630
  %v1236 = vunpack.c.l.b16 %v631
  %v1237 = vunpack.c.h.b16 %v631
  %v1238 = vunpack.c.l.b16 %v632
  %v1239 = vunpack.c.h.b16 %v632
  %v1240 = vunpack.c.l.b16 %v633
  %v1241 = vunpack.c.h.b16 %v633
  %v1242 = vunpack.c.l.b16 %v634
  %v1243 = vpack.c.b16 %v868, %v843
  %v1244 = vpack.c.b16 %v869, %v844
  %v1245 = vpack.c.b16 %v870, %v845
  %v1246 = vpack.c.b16 %v871, %v846
  %v1247 = vpack.c.b16 %v872, %v847
  %v1248 = vpack.c.b16 %v873, %v848
  %v1249 = vpack.c.b16 %v874, %v849
  %v1250 = vpack.c.b16 %v875, %v850
  %v1251 = vpack.c.b16 %v876, %v851
  %v1252 = vpack.c.b16 %v877, %v852
  %v1253 = vpack.c.b16 %v878, %v853
  %v1254 = vpack.c.b16 %v879, %v854
  %v1255 = vpack.c.b16 %v880, %v855
  %v1256 = vpack.c.b16 %v881, %v856
  %v1257 = vpack.c.b16 %v882, %v857
  %v1258 = vpack.c.b16 %v883, %v858
  %v1259 = vpack.c.b16 %v884, %v859
  %v1260 = vpack.c.b16 %v885, %v860
  %v1261 = vpack.c.b16 %v886, %v861
  %v1262 = vpack.c.b16 %v887, %v862
  %v1263 = vpack.c.b16 %v888, %v863
  %v1264 = vpack.c.b16 %v889, %v864
  %v1265 = vpack.c.b16 %v890, %v865
  %v1266 = vpack.c.b16 %v891, %v866
  %v1267 = vpack.c.b16 %v892, %v867
  %v1268 = vpack.c.b16 %v918, %v893
  %v1269 = vpack.c.b16 %v919, %v894
  %v1270 = vpack.c.b16 %v920, %v895
  %v1271 = vpack.c.b16 %v921, %v896
  %v1272 = vpack.c.b16 %v922, %v897
  %v1273 = vpack.c.b16 %v923, %v898
  %v1274 = vpack.c.b16 %v924, %v899
  %v1275 = vpack.c.b16 %v925, %v900
  %v1276 = vpack.c.b16 %v926, %v901
  %v1277 = vpack.c.b16 %v927, %v902
  %v1278 = vpack.c.b16 %v928, %v903
  %v1279 = vpack.c.b16 %v929, %v904
  %v1280 = vpack.c.b16 %v930, %v905
  %v1281 = vpack.c.b16 %v931, %v906
  %v1282 = vpack.c.b16 %v932, %v907
  %v1283 = vpack.c.b16 %v933, %v908
  %v1284 = vpack.c.b16 %v934, %v909
  %v1285 = vpack.c.b16 %v935, %v910
  %v1286 = vpack.c.b16 %v936, %v911
  %v1287 = vpack.c.b16 %v937, %v912
  %v1288 = vpack.c.b16 %v938, %v913
  %v1289 = vpack.c.b16 %v939, %v914
  %v1290 = vpack.c.b16 %v940, %v915
  %v1291 = vpack.c.b16 %v941, %v916
  %v1292 = vpack.c.b16 %v942, %v917
  %v1293 = vpack.c.b16 %v968, %v943
  %v1294 = vpack.c.b16 %v969, %v944
  %v1295 = vpack.c.b16 %v970, %v945
  %v1296 = vpack.c.b16 %v971, %v946
  %v1297 = vpack.c.b16 %v972, %v947
  %v1298 = vpack.c.b16 %v973, %v948
  %v1299 = vpack.c.b16 %v974, %v949
  %v1300 = vpack.c.b16 %v975, %v950
  %v1301 = vpack.c.b16 %v976, %v951
  %v1302 = vpack.c.b16 %v977, %v952
  %v1303 = vpack.c.b16 %v978, %v953
  %v1304 = vpack.c.b16 %v979, %v954
  %v1305 = vpack.c.b16 %v980, %v955
  %v1306 = vpack.c.b16 %v981, %v956
  %v1307 = vpack.c.b16 %v982, %v957
  %v1308 = vpack.c.b16 %v983, %v958
  %v1309 = vpack.c.b16 %v984, %v959
  %v1310 = vpack.c.b16 %v985, %v960
  %v1311 = vpack.c.b16 %v986, %v961
  %v1312 = vpack.c.b16 %v987, %v962
  %v1313 = vpack.c.b16 %v988, %v963
  %v1314 = vpack.c.b16 %v989, %v964
  %v1315 = vpack.c.b16 %v990, %v965
  %v1316 = vpack.c.b16 %v991, %v966
  %v1317 = vpack.c.b16 %v992, %v967
  %v1318 = vpack.c.b16 %v1018, %v993
  %v1319 = vpack.c.b16 %v1019, %v994
  %v1320 = vpack.c.b16 %v1020, %v995
  %v1321 = vpack.c.b16 %v1021, %v996
  %v1322 = vpack.c.b16 %v1022, %v997
  %v1323 = vpack.c.b16 %v1023, %v998
  %v1324 = vpack.c.b16 %v1024, %v999
  %v1325 = vpack.c.b16 %v1025, %v1000
  %v1326 = vpack.c.b16 %v1026, %v1001
  %v1327 = vpack.c.b16 %v1027, %v1002
  %v1328 = vpack.c.b16 %v1028, %v1003
  %v1329 = vpack.c.b16 %v1029, %v1004
  %v1330 = vpack.c.b16 %v1030, %v1005
  %v1331 = vpack.c.b16 %v1031, %v1006
  %v1332 = vpack.c.b16 %v1032, %v1007
  %v1333 = vpack.c.b16 %v1033, %v1008
  %v1334 = vpack.c.b16 %v1034, %v1009
  %v1335 = vpack.c.b16 %v1035, %v1010
  %v1336 = vpack.c.b16 %v1036, %v1011
  %v1337 = vpack.c.b16 %v1037, %v1012
  %v1338 = vpack.c.b16 %v1038, %v1013
  %v1339 = vpack.c.b16 %v1039, %v1014
  %v1340 = vpack.c.b16 %v1040, %v1015
  %v1341 = vpack.c.b16 %v1041, %v1016
  %v1342 = vpack.c.b16 %v1042, %v1017
  %v1343 = vpack.c.b16 %v1068, %v1043
  %v1344 = vpack.c.b16 %v1069, %v1044
  %v1345 = vpack.c.b16 %v1070, %v1045
  %v1346 = vpack.c.b16 %v1071, %v1046
  %v1347 = vpack.c.b16 %v1072, %v1047
  %v1348 = vpack.c.b16 %v1073, %v1048
  %v1349 = vpack.c.b16 %v1074, %v1049
  %v1350 = vpack.c.b16 %v1075, %v1050
  %v1351 = vpack.c.b16 %v1076, %v1051
  %v1352 = vpack.c.b16 %v1077, %v1052
  %v1353 = vpack.c.b16 %v1078, %v1053
  %v1354 = vpack.c.b16 %v1079, %v1054
  %v1355 = vpack.c.b16 %v1080, %v1055
  %v1356 = vpack.c.b16 %v1081, %v1056
  %v1357 = vpack.c.b16 %v1082, %v1057
  %v1358 = vpack.c.b16 %v1083, %v1058
  %v1359 = vpack.c.b16 %v1084, %v1059
  %v1360 = vpack.c.b16 %v1085, %v1060
  %v1361 = vpack.c.b16 %v1086, %v1061
  %v1362 = vpack.c.b16 %v1087, %v1062
  %v1363 = vpack.c.b16 %v1088, %v1063
  %v1364 = vpack.c.b16 %v1089, %v1064
  %v1365 = vpack.c.b16 %v1090, %v1065
  %v1366 = vpack.c.b16 %v1091, %v1066
  %v1367 = vpack.c.b16 %v1092, %v1067
  %v1368 = vpack.c.b16 %v1118, %v1093
  %v1369 = vpack.c.b16 %v1119, %v1094
  %v1370 = vpack.c.b16 %v1120, %v1095
  %v1371 = vpack.c.b16 %v1121, %v1096
  %v1372 = vpack.c.b16 %v1122, %v1097
  %v1373 = vpack.c.b16 %v1123, %v1098
  %v1374 = vpack.c.b16 %v1124, %v1099
  %v1375 = vpack.c.b16 %v1125, %v1100
  %v1376 = vpack.c.b16 %v1126, %v1101
  %v1377 = vpack.c.b16 %v1127, %v1102
  %v1378 = vpack.c.b16 %v1128, %v1103
  %v1379 = vpack.c.b16 %v1129, %v1104
  %v1380 = vpack.c.b16 %v1130, %v1105
  %v1381 = vpack.c.b16 %v1131, %v1106
  %v1382 = vpack.c.b16 %v1132, %v1107
  %v1383 = vpack.c.b16 %v1133, %v1108
  %v1384 = vpack.c.b16 %v1134, %v1109
  %v1385 = vpack.c.b16 %v1135, %v1110
  %v1386 = vpack.c.b16 %v1136, %v1111
  %v1387 = vpack.c.b16 %v1137, %v1112
  %v1388 = vpack.c.b16 %v1138, %v1113
  %v1389 = vpack.c.b16 %v1139, %v1114
  %v1390 = vpack.c.b16 %v1140, %v1115
  %v1391 = vpack.c.b16 %v1141, %v1116
  %v1392 = vpack.c.b16 %v1142, %v1117
  %v1393 = vpack.c.b16 %v1168, %v1143
  %v1394 = vpack.c.b16 %v1169, %v1144
  %v1395 = vpack.c.b16 %v1170, %v1145
  %v1396 = vpack.c.b16 %v1171, %v1146
  %v1397 = vpack.c.b16 %v1172, %v1147
  %v1398 = vpack.c.b16 %v1173, %v1148
  %v1399 = vpack.c.b16 %v1174, %v1149
  %v1400 = vpack.c.b16 %v1175, %v1150
  %v1401 = vpack.c.b16 %v1176, %v1151
  %v1402 = vpack.c.b16 %v1177, %v1152
  %v1403 = vpack.c.b16 %v1178, %v1153
  %v1404 = vpack.c.b16 %v1179, %v1154
  %v1405 = vpack.c.b16 %v1180, %v1155
  %v1406 = vpack.c.b16 %v1181, %v1156
  %v1407 = vpack.c.b16 %v1182, %v1157
  %v1408 = vpack.c.b16 %v1183, %v1158
  %v1409 = vpack.c.b16 %v1184, %v1159
  %v1410 = vpack.c.b16 %v1185, %v1160
  %v1411 = vpack.c.b16 %v1186, %v1161
  %v1412 = vpack.c.b16 %v1187, %v1162
  %v1413 = vpack.c.b16 %v1188, %v1163
  %v1414 = vpack.c.b16 %v1189, %v1164
  %v1415 = vpack.c.b16 %v1190, %v1165
  %v1416 = vpack.c.b16 %v1191, %v1166
  %v1417 = vpack.c.b16 %v1192, %v1167
  %v1418 = vpack.c.b16 %v1218, %v1193
  %v1419 = vpack.c.b16 %v1219, %v1194
  %v1420 = vpack.c.b16 %v1220, %v1195
  %v1421 = vpack.c.b16 %v1221, %v1196
  %v1422 = vpack.c.b16 %v1222, %v1197
  %v1423 = vpack.c.b16 %v1223, %v1198
  %v1424 = vpack.c.b16 %v1224, %v1199
  %v1425 = vpack.c.b16 %v1225, %v1200
  %v1426 = vpack.c.b16 %v1226, %v1201
  %v1427 = vpack.c.b16 %v1227, %v1202
  %v1428 = vpack.c.b16 %v1228, %v1203
  %v1429 = vpack.c.b16 %v1229, %v1204
  %v1430 = vpack.c.b16 %v1230, %v1205
  %v1431 = vpack.c.b16 %v1231, %v1206
  %v1432 = vpack.c.b16 %v1232, %v1207
  %v1433 = vpack.c.b16 %v1233, %v1208
  %v1434 = vpack.c.b16 %v1234, %v1209
  %v1435 = vpack.c.b16 %v1235, %v1210
  %v1436 = vpack.c.b16 %v1236, %v1211
  %v1437 = vpack.c.b16 %v1237, %v1212
  %v1438 = vpack.c.b16 %v1238, %v1213
  %v1439 = vpack.c.b16 %v1239, %v1214
  %v1440 = vpack.c.b16 %v1240, %v1215
  %v1441 = vpack.c.b16 %v1241, %v1216
  %v1442 = vpack.c.b16 %v1242, %v1217
  %1643 = vmatpush.bf16.msra.mxu0 %v1418
  %1644 = vmatpush.bf16.msra.mxu0 %v1393
  %1645 = vmatpush.bf16.msra.mxu0 %v1368
  %1646 = vmatpush.bf16.msra.mxu0 %v1343
  %1647 = vmatpush.bf16.msra.mxu0 %v1318
  %1648 = vmatpush.bf16.msra.mxu0 %v1293
  %1649 = vmatpush.bf16.msra.mxu0 %v1268
  %1650 = vmatpush.bf16.msra.mxu0 %v1243
  %1651 = vmatmul.bf16.gmra.mxu0 %v426
  %v1652 = vpop.f32.mrf.mxu0
  %v1653 = vadd.f32 0.0, %v1652
  %v1654 = vpop.f32.mrf.mxu0
  %v1655 = vadd.f32 0.0, %v1654
  %1656 = vdwg.mxu0
  %1657 = vmatpush.bf16.msra.mxu0 %v1419
  %1658 = vmatpush.bf16.msra.mxu0 %v1394
  %1659 = vmatpush.bf16.msra.mxu0 %v1369
  %1660 = vmatpush.bf16.msra.mxu0 %v1344
  %1661 = vmatpush.bf16.msra.mxu0 %v1319
  %1662 = vmatpush.bf16.msra.mxu0 %v1294
  %1663 = vmatpush.bf16.msra.mxu0 %v1269
  %1664 = vmatpush.bf16.msra.mxu0 %v1244
  %1665 = vmatmul.bf16.gmra.mxu0 %v426
  %v1666 = vpop.f32.mrf.mxu0
  %v1667 = vadd.f32 0.0, %v1666
  %v1668 = vpop.f32.mrf.mxu0
  %v1669 = vadd.f32 0.0, %v1668
  %1670 = vdwg.mxu0
  %1671 = vmatpush.bf16.msra.mxu0 %v1420
  %1672 = vmatpush.bf16.msra.mxu0 %v1395
  %1673 = vmatpush.bf16.msra.mxu0 %v1370
  %1674 = vmatpush.bf16.msra.mxu0 %v1345
  %1675 = vmatpush.bf16.msra.mxu0 %v1320
  %1676 = vmatpush.bf16.msra.mxu0 %v1295
  %1677 = vmatpush.bf16.msra.mxu0 %v1270
  %1678 = vmatpush.bf16.msra.mxu0 %v1245
  %1679 = vmatmul.bf16.gmra.mxu0 %v426
  %v1680 = vpop.f32.mrf.mxu0
  %v1681 = vadd.f32 0.0, %v1680
  %v1682 = vpop.f32.mrf.mxu0
  %v1683 = vadd.f32 0.0, %v1682
  %1684 = vdwg.mxu0
  %1685 = vmatpush.bf16.msra.mxu0 %v1421
  %1686 = vmatpush.bf16.msra.mxu0 %v1396
  %1687 = vmatpush.bf16.msra.mxu0 %v1371
  %1688 = vmatpush.bf16.msra.mxu0 %v1346
  %1689 = vmatpush.bf16.msra.mxu0 %v1321
  %1690 = vmatpush.bf16.msra.mxu0 %v1296
  %1691 = vmatpush.bf16.msra.mxu0 %v1271
  %1692 = vmatpush.bf16.msra.mxu0 %v1246
  %1693 = vmatmul.bf16.gmra.mxu0 %v426
  %v1694 = vpop.f32.mrf.mxu0
  %v1695 = vadd.f32 0.0, %v1694
  %v1696 = vpop.f32.mrf.mxu0
  %v1697 = vadd.f32 0.0, %v1696
  %1698 = vdwg.mxu0
  %1699 = vmatpush.bf16.msra.mxu0 %v1422
  %1700 = vmatpush.bf16.msra.mxu0 %v1397
  %1701 = vmatpush.bf16.msra.mxu0 %v1372
  %1702 = vmatpush.bf16.msra.mxu0 %v1347
  %1703 = vmatpush.bf16.msra.mxu0 %v1322
  %1704 = vmatpush.bf16.msra.mxu0 %v1297
  %1705 = vmatpush.bf16.msra.mxu0 %v1272
  %1706 = vmatpush.bf16.msra.mxu0 %v1247
  %1707 = vmatmul.bf16.gmra.mxu0 %v426
  %v1708 = vpop.f32.mrf.mxu0
  %v1709 = vadd.f32 0.0, %v1708
  %v1710 = vpop.f32.mrf.mxu0
  %v1711 = vadd.f32 0.0, %v1710
  %1712 = vdwg.mxu0
  %1713 = vmatpush.bf16.msra.mxu0 %v1423
  %1714 = vmatpush.bf16.msra.mxu0 %v1398
  %1715 = vmatpush.bf16.msra.mxu0 %v1373
  %1716 = vmatpush.bf16.msra.mxu0 %v1348
  %1717 = vmatpush.bf16.msra.mxu0 %v1323
  %1718 = vmatpush.bf16.msra.mxu0 %v1298
  %1719 = vmatpush.bf16.msra.mxu0 %v1273
  %1720 = vmatpush.bf16.msra.mxu0 %v1248
  %1721 = vmatmul.bf16.gmra.mxu0 %v426
  %v1722 = vpop.f32.mrf.mxu0
  %v1723 = vadd.f32 0.0, %v1722
  %v1724 = vpop.f32.mrf.mxu0
  %v1725 = vadd.f32 0.0, %v1724
  %1726 = vdwg.mxu0
  %1727 = vmatpush.bf16.msra.mxu0 %v1424
  %1728 = vmatpush.bf16.msra.mxu0 %v1399
  %1729 = vmatpush.bf16.msra.mxu0 %v1374
  %1730 = vmatpush.bf16.msra.mxu0 %v1349
  %1731 = vmatpush.bf16.msra.mxu0 %v1324
  %1732 = vmatpush.bf16.msra.mxu0 %v1299
  %1733 = vmatpush.bf16.msra.mxu0 %v1274
  %1734 = vmatpush.bf16.msra.mxu0 %v1249
  %1735 = vmatmul.bf16.gmra.mxu0 %v426
  %v1736 = vpop.f32.mrf.mxu0
  %v1737 = vadd.f32 0.0, %v1736
  %v1738 = vpop.f32.mrf.mxu0
  %v1739 = vadd.f32 0.0, %v1738
  %1740 = vdwg.mxu0
  %1741 = vmatpush.bf16.msra.mxu0 %v1425
  %1742 = vmatpush.bf16.msra.mxu0 %v1400
  %1743 = vmatpush.bf16.msra.mxu0 %v1375
  %1744 = vmatpush.bf16.msra.mxu0 %v1350
  %1745 = vmatpush.bf16.msra.mxu0 %v1325
  %1746 = vmatpush.bf16.msra.mxu0 %v1300
  %1747 = vmatpush.bf16.msra.mxu0 %v1275
  %1748 = vmatpush.bf16.msra.mxu0 %v1250
  %1749 = vmatmul.bf16.gmra.mxu0 %v426
  %v1750 = vpop.f32.mrf.mxu0
  %v1751 = vadd.f32 0.0, %v1750
  %v1752 = vpop.f32.mrf.mxu0
  %v1753 = vadd.f32 0.0, %v1752
  %1754 = vdwg.mxu0
  %1755 = vmatpush.bf16.msra.mxu0 %v1426
  %1756 = vmatpush.bf16.msra.mxu0 %v1401
  %1757 = vmatpush.bf16.msra.mxu0 %v1376
  %1758 = vmatpush.bf16.msra.mxu0 %v1351
  %1759 = vmatpush.bf16.msra.mxu0 %v1326
  %1760 = vmatpush.bf16.msra.mxu0 %v1301
  %1761 = vmatpush.bf16.msra.mxu0 %v1276
  %1762 = vmatpush.bf16.msra.mxu0 %v1251
  %1763 = vmatmul.bf16.gmra.mxu0 %v426
  %v1764 = vpop.f32.mrf.mxu0
  %v1765 = vadd.f32 0.0, %v1764
  %v1766 = vpop.f32.mrf.mxu0
  %v1767 = vadd.f32 0.0, %v1766
  %1768 = vdwg.mxu0
  %1769 = vmatpush.bf16.msra.mxu0 %v1427
  %1770 = vmatpush.bf16.msra.mxu0 %v1402
  %1771 = vmatpush.bf16.msra.mxu0 %v1377
  %1772 = vmatpush.bf16.msra.mxu0 %v1352
  %1773 = vmatpush.bf16.msra.mxu0 %v1327
  %1774 = vmatpush.bf16.msra.mxu0 %v1302
  %1775 = vmatpush.bf16.msra.mxu0 %v1277
  %1776 = vmatpush.bf16.msra.mxu0 %v1252
  %1777 = vmatmul.bf16.gmra.mxu0 %v426
  %v1778 = vpop.f32.mrf.mxu0
  %v1779 = vadd.f32 0.0, %v1778
  %v1780 = vpop.f32.mrf.mxu0
  %v1781 = vadd.f32 0.0, %v1780
  %1782 = vdwg.mxu0
  %1783 = vmatpush.bf16.msra.mxu0 %v1428
  %1784 = vmatpush.bf16.msra.mxu0 %v1403
  %1785 = vmatpush.bf16.msra.mxu0 %v1378
  %1786 = vmatpush.bf16.msra.mxu0 %v1353
  %1787 = vmatpush.bf16.msra.mxu0 %v1328
  %1788 = vmatpush.bf16.msra.mxu0 %v1303
  %1789 = vmatpush.bf16.msra.mxu0 %v1278
  %1790 = vmatpush.bf16.msra.mxu0 %v1253
  %1791 = vmatmul.bf16.gmra.mxu0 %v426
  %v1792 = vpop.f32.mrf.mxu0
  %v1793 = vadd.f32 0.0, %v1792
  %v1794 = vpop.f32.mrf.mxu0
  %v1795 = vadd.f32 0.0, %v1794
  %1796 = vdwg.mxu0
  %1797 = vmatpush.bf16.msra.mxu0 %v1429
  %1798 = vmatpush.bf16.msra.mxu0 %v1404
  %1799 = vmatpush.bf16.msra.mxu0 %v1379
  %1800 = vmatpush.bf16.msra.mxu0 %v1354
  %1801 = vmatpush.bf16.msra.mxu0 %v1329
  %1802 = vmatpush.bf16.msra.mxu0 %v1304
  %1803 = vmatpush.bf16.msra.mxu0 %v1279
  %1804 = vmatpush.bf16.msra.mxu0 %v1254
  %1805 = vmatmul.bf16.gmra.mxu0 %v426
  %v1806 = vpop.f32.mrf.mxu0
  %v1807 = vadd.f32 0.0, %v1806
  %v1808 = vpop.f32.mrf.mxu0
  %v1809 = vadd.f32 0.0, %v1808
  %1810 = vdwg.mxu0
  %1811 = vmatpush.bf16.msra.mxu0 %v1430
  %1812 = vmatpush.bf16.msra.mxu0 %v1405
  %1813 = vmatpush.bf16.msra.mxu0 %v1380
  %1814 = vmatpush.bf16.msra.mxu0 %v1355
  %1815 = vmatpush.bf16.msra.mxu0 %v1330
  %1816 = vmatpush.bf16.msra.mxu0 %v1305
  %1817 = vmatpush.bf16.msra.mxu0 %v1280
  %1818 = vmatpush.bf16.msra.mxu0 %v1255
  %1819 = vmatmul.bf16.gmra.mxu0 %v426
  %v1820 = vpop.f32.mrf.mxu0
  %v1821 = vadd.f32 0.0, %v1820
  %v1822 = vpop.f32.mrf.mxu0
  %v1823 = vadd.f32 0.0, %v1822
  %1824 = vdwg.mxu0
  %1825 = vmatpush.bf16.msra.mxu0 %v1431
  %1826 = vmatpush.bf16.msra.mxu0 %v1406
  %1827 = vmatpush.bf16.msra.mxu0 %v1381
  %1828 = vmatpush.bf16.msra.mxu0 %v1356
  %1829 = vmatpush.bf16.msra.mxu0 %v1331
  %1830 = vmatpush.bf16.msra.mxu0 %v1306
  %1831 = vmatpush.bf16.msra.mxu0 %v1281
  %1832 = vmatpush.bf16.msra.mxu0 %v1256
  %1833 = vmatmul.bf16.gmra.mxu0 %v426
  %v1834 = vpop.f32.mrf.mxu0
  %v1835 = vadd.f32 0.0, %v1834
  %v1836 = vpop.f32.mrf.mxu0
  %v1837 = vadd.f32 0.0, %v1836
  %1838 = vdwg.mxu0
  %1839 = vmatpush.bf16.msra.mxu0 %v1432
  %1840 = vmatpush.bf16.msra.mxu0 %v1407
  %1841 = vmatpush.bf16.msra.mxu0 %v1382
  %1842 = vmatpush.bf16.msra.mxu0 %v1357
  %1843 = vmatpush.bf16.msra.mxu0 %v1332
  %1844 = vmatpush.bf16.msra.mxu0 %v1307
  %1845 = vmatpush.bf16.msra.mxu0 %v1282
  %1846 = vmatpush.bf16.msra.mxu0 %v1257
  %1847 = vmatmul.bf16.gmra.mxu0 %v426
  %v1848 = vpop.f32.mrf.mxu0
  %v1849 = vadd.f32 0.0, %v1848
  %v1850 = vpop.f32.mrf.mxu0
  %v1851 = vadd.f32 0.0, %v1850
  %1852 = vdwg.mxu0
  %1853 = vmatpush.bf16.msra.mxu0 %v1433
  %1854 = vmatpush.bf16.msra.mxu0 %v1408
  %1855 = vmatpush.bf16.msra.mxu0 %v1383
  %1856 = vmatpush.bf16.msra.mxu0 %v1358
  %1857 = vmatpush.bf16.msra.mxu0 %v1333
  %1858 = vmatpush.bf16.msra.mxu0 %v1308
  %1859 = vmatpush.bf16.msra.mxu0 %v1283
  %1860 = vmatpush.bf16.msra.mxu0 %v1258
  %1861 = vmatmul.bf16.gmra.mxu0 %v426
  %v1862 = vpop.f32.mrf.mxu0
  %v1863 = vadd.f32 0.0, %v1862
  %v1864 = vpop.f32.mrf.mxu0
  %v1865 = vadd.f32 0.0, %v1864
  %1866 = vdwg.mxu0
  %1867 = vmatpush.bf16.msra.mxu0 %v1434
  %1868 = vmatpush.bf16.msra.mxu0 %v1409
  %1869 = vmatpush.bf16.msra.mxu0 %v1384
  %1870 = vmatpush.bf16.msra.mxu0 %v1359
  %1871 = vmatpush.bf16.msra.mxu0 %v1334
  %1872 = vmatpush.bf16.msra.mxu0 %v1309
  %1873 = vmatpush.bf16.msra.mxu0 %v1284
  %1874 = vmatpush.bf16.msra.mxu0 %v1259
  %1875 = vmatmul.bf16.gmra.mxu0 %v426
  %v1876 = vpop.f32.mrf.mxu0
  %v1877 = vadd.f32 0.0, %v1876
  %v1878 = vpop.f32.mrf.mxu0
  %v1879 = vadd.f32 0.0, %v1878
  %1880 = vdwg.mxu0
  %1881 = vmatpush.bf16.msra.mxu0 %v1435
  %1882 = vmatpush.bf16.msra.mxu0 %v1410
  %1883 = vmatpush.bf16.msra.mxu0 %v1385
  %1884 = vmatpush.bf16.msra.mxu0 %v1360
  %1885 = vmatpush.bf16.msra.mxu0 %v1335
  %1886 = vmatpush.bf16.msra.mxu0 %v1310
  %1887 = vmatpush.bf16.msra.mxu0 %v1285
  %1888 = vmatpush.bf16.msra.mxu0 %v1260
  %1889 = vmatmul.bf16.gmra.mxu0 %v426
  %v1890 = vpop.f32.mrf.mxu0
  %v1891 = vadd.f32 0.0, %v1890
  %v1892 = vpop.f32.mrf.mxu0
  %v1893 = vadd.f32 0.0, %v1892
  %1894 = vdwg.mxu0
  %1895 = vmatpush.bf16.msra.mxu0 %v1436
  %1896 = vmatpush.bf16.msra.mxu0 %v1411
  %1897 = vmatpush.bf16.msra.mxu0 %v1386
  %1898 = vmatpush.bf16.msra.mxu0 %v1361
  %1899 = vmatpush.bf16.msra.mxu0 %v1336
  %1900 = vmatpush.bf16.msra.mxu0 %v1311
  %1901 = vmatpush.bf16.msra.mxu0 %v1286
  %1902 = vmatpush.bf16.msra.mxu0 %v1261
  %1903 = vmatmul.bf16.gmra.mxu0 %v426
  %v1904 = vpop.f32.mrf.mxu0
  %v1905 = vadd.f32 0.0, %v1904
  %v1906 = vpop.f32.mrf.mxu0
  %v1907 = vadd.f32 0.0, %v1906
  %1908 = vdwg.mxu0
  %1909 = vmatpush.bf16.msra.mxu0 %v1437
  %1910 = vmatpush.bf16.msra.mxu0 %v1412
  %1911 = vmatpush.bf16.msra.mxu0 %v1387
  %1912 = vmatpush.bf16.msra.mxu0 %v1362
  %1913 = vmatpush.bf16.msra.mxu0 %v1337
  %1914 = vmatpush.bf16.msra.mxu0 %v1312
  %1915 = vmatpush.bf16.msra.mxu0 %v1287
  %1916 = vmatpush.bf16.msra.mxu0 %v1262
  %1917 = vmatmul.bf16.gmra.mxu0 %v426
  %v1918 = vpop.f32.mrf.mxu0
  %v1919 = vadd.f32 0.0, %v1918
  %v1920 = vpop.f32.mrf.mxu0
  %v1921 = vadd.f32 0.0, %v1920
  %1922 = vdwg.mxu0
  %1923 = vmatpush.bf16.msra.mxu0 %v1438
  %1924 = vmatpush.bf16.msra.mxu0 %v1413
  %1925 = vmatpush.bf16.msra.mxu0 %v1388
  %1926 = vmatpush.bf16.msra.mxu0 %v1363
  %1927 = vmatpush.bf16.msra.mxu0 %v1338
  %1928 = vmatpush.bf16.msra.mxu0 %v1313
  %1929 = vmatpush.bf16.msra.mxu0 %v1288
  %1930 = vmatpush.bf16.msra.mxu0 %v1263
  %1931 = vmatmul.bf16.gmra.mxu0 %v426
  %v1932 = vpop.f32.mrf.mxu0
  %v1933 = vadd.f32 0.0, %v1932
  %v1934 = vpop.f32.mrf.mxu0
  %v1935 = vadd.f32 0.0, %v1934
  %1936 = vdwg.mxu0
  %1937 = vmatpush.bf16.msra.mxu0 %v1439
  %1938 = vmatpush.bf16.msra.mxu0 %v1414
  %1939 = vmatpush.bf16.msra.mxu0 %v1389
  %1940 = vmatpush.bf16.msra.mxu0 %v1364
  %1941 = vmatpush.bf16.msra.mxu0 %v1339
  %1942 = vmatpush.bf16.msra.mxu0 %v1314
  %1943 = vmatpush.bf16.msra.mxu0 %v1289
  %1944 = vmatpush.bf16.msra.mxu0 %v1264
  %1945 = vmatmul.bf16.gmra.mxu0 %v426
  %v1946 = vpop.f32.mrf.mxu0
  %v1947 = vadd.f32 0.0, %v1946
  %v1948 = vpop.f32.mrf.mxu0
  %v1949 = vadd.f32 0.0, %v1948
  %1950 = vdwg.mxu0
  %1951 = vmatpush.bf16.msra.mxu0 %v1440
  %1952 = vmatpush.bf16.msra.mxu0 %v1415
  %1953 = vmatpush.bf16.msra.mxu0 %v1390
  %1954 = vmatpush.bf16.msra.mxu0 %v1365
  %1955 = vmatpush.bf16.msra.mxu0 %v1340
  %1956 = vmatpush.bf16.msra.mxu0 %v1315
  %1957 = vmatpush.bf16.msra.mxu0 %v1290
  %1958 = vmatpush.bf16.msra.mxu0 %v1265
  %1959 = vmatmul.bf16.gmra.mxu0 %v426
  %v1960 = vpop.f32.mrf.mxu0
  %v1961 = vadd.f32 0.0, %v1960
  %v1962 = vpop.f32.mrf.mxu0
  %v1963 = vadd.f32 0.0, %v1962
  %1964 = vdwg.mxu0
  %1965 = vmatpush.bf16.msra.mxu0 %v1441
  %1966 = vmatpush.bf16.msra.mxu0 %v1416
  %1967 = vmatpush.bf16.msra.mxu0 %v1391
  %1968 = vmatpush.bf16.msra.mxu0 %v1366
  %1969 = vmatpush.bf16.msra.mxu0 %v1341
  %1970 = vmatpush.bf16.msra.mxu0 %v1316
  %1971 = vmatpush.bf16.msra.mxu0 %v1291
  %1972 = vmatpush.bf16.msra.mxu0 %v1266
  %1973 = vmatmul.bf16.gmra.mxu0 %v426
  %v1974 = vpop.f32.mrf.mxu0
  %v1975 = vadd.f32 0.0, %v1974
  %v1976 = vpop.f32.mrf.mxu0
  %v1977 = vadd.f32 0.0, %v1976
  %1978 = vdwg.mxu0
  %1979 = vmatpush.bf16.msra.mxu0 %v1442
  %1980 = vmatpush.bf16.msra.mxu0 %v1417
  %1981 = vmatpush.bf16.msra.mxu0 %v1392
  %1982 = vmatpush.bf16.msra.mxu0 %v1367
  %1983 = vmatpush.bf16.msra.mxu0 %v1342
  %1984 = vmatpush.bf16.msra.mxu0 %v1317
  %1985 = vmatpush.bf16.msra.mxu0 %v1292
  %1986 = vmatpush.bf16.msra.mxu0 %v1267
  %1987 = vmatmul.bf16.gmra.mxu0 %v426
  %v1988 = vpop.f32.mrf.mxu0
  %v1989 = vadd.f32 0.0, %v1988
  %v1990 = vpop.f32.mrf.mxu0
  %v1991 = vadd.f32 0.0, %v1990
  %1992 = vdwg.mxu0
  %v1993 = vpack.c.bf16 %v1667, %v1653
  %v1994 = vpack.c.bf16 %v1695, %v1681
  %v1995 = vpack.c.bf16 %v1723, %v1709
  %v1996 = vpack.c.bf16 %v1751, %v1737
  %v1997 = vpack.c.bf16 %v1779, %v1765
  %v1998 = vpack.c.bf16 %v1807, %v1793
  %v1999 = vpack.c.bf16 %v1835, %v1821
  %v2000 = vpack.c.bf16 %v1863, %v1849
  %v2001 = vpack.c.bf16 %v1891, %v1877
  %v2002 = vpack.c.bf16 %v1919, %v1905
  %v2003 = vpack.c.bf16 %v1947, %v1933
  %v2004 = vpack.c.bf16 %v1975, %v1961
  %v2005 = vpack.c.bf16 %v1989, %v1989
  %v2006 = vpack.c.bf16 %v1669, %v1655
  %v2007 = vpack.c.bf16 %v1697, %v1683
  %v2008 = vpack.c.bf16 %v1725, %v1711
  %v2009 = vpack.c.bf16 %v1753, %v1739
  %v2010 = vpack.c.bf16 %v1781, %v1767
  %v2011 = vpack.c.bf16 %v1809, %v1795
  %v2012 = vpack.c.bf16 %v1837, %v1823
  %v2013 = vpack.c.bf16 %v1865, %v1851
  %v2014 = vpack.c.bf16 %v1893, %v1879
  %v2015 = vpack.c.bf16 %v1921, %v1907
  %v2016 = vpack.c.bf16 %v1949, %v1935
  %v2017 = vpack.c.bf16 %v1977, %v1963
  %v2018 = vpack.c.bf16 %v1991, %v1991
  %v2021 = vunpack.c.l.b16 %v1993
  %v2022 = vunpack.c.l.b16 %v2006
  %v2023 = vpack.c.b16 %v2022, %v2021
  %v2025 = vunpack.c.h.b16 %v1993
  %v2026 = vunpack.c.h.b16 %v2006
  %v2027 = vpack.c.b16 %v2026, %v2025
  %v2031 = vunpack.c.l.b16 %v1994
  %v2032 = vunpack.c.l.b16 %v2007
  %v2033 = vpack.c.b16 %v2032, %v2031
  %v2035 = vunpack.c.h.b16 %v1994
  %v2036 = vunpack.c.h.b16 %v2007
  %v2037 = vpack.c.b16 %v2036, %v2035
  %v2041 = vunpack.c.l.b16 %v1995
  %v2042 = vunpack.c.l.b16 %v2008
  %v2043 = vpack.c.b16 %v2042, %v2041
  %v2045 = vunpack.c.h.b16 %v1995
  %v2046 = vunpack.c.h.b16 %v2008
  %v2047 = vpack.c.b16 %v2046, %v2045
  %v2051 = vunpack.c.l.b16 %v1996
  %v2052 = vunpack.c.l.b16 %v2009
  %v2053 = vpack.c.b16 %v2052, %v2051
  %v2055 = vunpack.c.h.b16 %v1996
  %v2056 = vunpack.c.h.b16 %v2009
  %v2057 = vpack.c.b16 %v2056, %v2055
  %v2061 = vunpack.c.l.b16 %v1997
  %v2062 = vunpack.c.l.b16 %v2010
  %v2063 = vpack.c.b16 %v2062, %v2061
  %v2065 = vunpack.c.h.b16 %v1997
  %v2066 = vunpack.c.h.b16 %v2010
  %v2067 = vpack.c.b16 %v2066, %v2065
  %v2071 = vunpack.c.l.b16 %v1998
  %v2072 = vunpack.c.l.b16 %v2011
  %v2073 = vpack.c.b16 %v2072, %v2071
  %v2075 = vunpack.c.h.b16 %v1998
  %v2076 = vunpack.c.h.b16 %v2011
  %v2077 = vpack.c.b16 %v2076, %v2075
  %v2081 = vunpack.c.l.b16 %v1999
  %v2082 = vunpack.c.l.b16 %v2012
  %v2083 = vpack.c.b16 %v2082, %v2081
  %v2085 = vunpack.c.h.b16 %v1999
  %v2086 = vunpack.c.h.b16 %v2012
  %v2087 = vpack.c.b16 %v2086, %v2085
  %v2091 = vunpack.c.l.b16 %v2000
  %v2092 = vunpack.c.l.b16 %v2013
  %v2093 = vpack.c.b16 %v2092, %v2091
  %v2095 = vunpack.c.h.b16 %v2000
  %v2096 = vunpack.c.h.b16 %v2013
  %v2097 = vpack.c.b16 %v2096, %v2095
  %v2101 = vunpack.c.l.b16 %v2001
  %v2102 = vunpack.c.l.b16 %v2014
  %v2103 = vpack.c.b16 %v2102, %v2101
  %v2105 = vunpack.c.h.b16 %v2001
  %v2106 = vunpack.c.h.b16 %v2014
  %v2107 = vpack.c.b16 %v2106, %v2105
  %v2111 = vunpack.c.l.b16 %v2002
  %v2112 = vunpack.c.l.b16 %v2015
  %v2113 = vpack.c.b16 %v2112, %v2111
  %v2115 = vunpack.c.h.b16 %v2002
  %v2116 = vunpack.c.h.b16 %v2015
  %v2117 = vpack.c.b16 %v2116, %v2115
  %v2121 = vunpack.c.l.b16 %v2003
  %v2122 = vunpack.c.l.b16 %v2016
  %v2123 = vpack.c.b16 %v2122, %v2121
  %v2125 = vunpack.c.h.b16 %v2003
  %v2126 = vunpack.c.h.b16 %v2016
  %v2127 = vpack.c.b16 %v2126, %v2125
  %v2131 = vunpack.c.l.b16 %v2004
  %v2132 = vunpack.c.l.b16 %v2017
  %v2133 = vpack.c.b16 %v2132, %v2131
  %v2135 = vunpack.c.h.b16 %v2004
  %v2136 = vunpack.c.h.b16 %v2017
  %v2137 = vpack.c.b16 %v2136, %v2135
  %v2141 = vunpack.c.l.b16 %v2005
  %v2142 = vunpack.c.l.b16 %v2018
  %v2143 = vpack.c.b16 %v2142, %v2141
  %v2145 = vld [vmem:[%s4] sm:$0xff]
  %v2146 = vld [vmem:[%s4 + $0x8] sm:$0xff]
  %v2147 = vld [vmem:[%s4 + $0x10] sm:$0xff]
  %v2148 = vld [vmem:[%s4 + $0x18] sm:$0xff]
  %v2149 = vld [vmem:[%s4 + $0x20] sm:$0xff]
  %v2150 = vld [vmem:[%s4 + $0x28] sm:$0xff]
  %v2151 = vld [vmem:[%s4 + $0x30] sm:$0xff]
  %v2152 = vld [vmem:[%s4 + $0x38] sm:$0xff]
  %v2153 = vld [vmem:[%s4 + $0x40] sm:$0xff]
  %v2154 = vld [vmem:[%s4 + $0x48] sm:$0xff]
  %v2155 = vld [vmem:[%s4 + $0x50] sm:$0xff]
  %v2156 = vld [vmem:[%s4 + $0x58] sm:$0xff]
  %v2157 = vld [vmem:[%s4 + $0x60] sm:$0xff]
  %v2158 = vld [vmem:[%s4 + $0x68] sm:$0xff]
  %v2159 = vld [vmem:[%s4 + $0x70] sm:$0xff]
  %v2160 = vld [vmem:[%s4 + $0x78] sm:$0xff]
  %v2161 = vld [vmem:[%s4 + $0x80] sm:$0xff]
  %v2162 = vld [vmem:[%s4 + $0x88] sm:$0xff]
  %v2163 = vld [vmem:[%s4 + $0x90] sm:$0xff]
  %v2164 = vld [vmem:[%s4 + $0x98] sm:$0xff]
  %v2165 = vld [vmem:[%s4 + $0xa0] sm:$0xff]
  %v2166 = vld [vmem:[%s4 + $0xa8] sm:$0xff]
  %v2167 = vld [vmem:[%s4 + $0xb0] sm:$0xff]
  %v2168 = vld [vmem:[%s4 + $0xb8] sm:$0xff]
  %v2169 = vld [vmem:[%s4 + $0xc0] sm:$0xff]
  %v2170 = vld [vmem:[%s4 + $0xc8] sm:$0xff]
  %v2171 = vld [vmem:[%s4 + $0xd0] sm:$0xff]
  %v2172 = vld [vmem:[%s4 + $0xd8] sm:$0xff]
  %v2173 = vld [vmem:[%s4 + $0xe0] sm:$0xff]
  %v2174 = vld [vmem:[%s4 + $0xe8] sm:$0xff]
  %v2175 = vld [vmem:[%s5] sm:$0xff]
  %v2176 = vld [vmem:[%s5 + $0x8] sm:$0xff]
  %v2177 = vld [vmem:[%s5 + $0x10] sm:$0xff]
  %v2178 = vld [vmem:[%s5 + $0x18] sm:$0xff]
  %v2179 = vld [vmem:[%s5 + $0x20] sm:$0xff]
  %v2180 = vld [vmem:[%s5 + $0x28] sm:$0xff]
  %v2181 = vld [vmem:[%s5 + $0x30] sm:$0xff]
  %v2182 = vld [vmem:[%s5 + $0x38] sm:$0xff]
  %v2183 = vld [vmem:[%s5 + $0x40] sm:$0xff]
  %v2184 = vld [vmem:[%s5 + $0x48] sm:$0xff]
  %v2185 = vld [vmem:[%s5 + $0x50] sm:$0xff]
  %v2186 = vld [vmem:[%s5 + $0x58] sm:$0xff]
  %v2187 = vld [vmem:[%s5 + $0x60] sm:$0xff]
  %v2188 = vld [vmem:[%s5 + $0x68] sm:$0xff]
  %v2189 = vld [vmem:[%s5 + $0x70] sm:$0xff]
  %2191 = vset.pattern.permute.xlu0 0
  %2192 = vperm.xlu0 %2191, %v2175
  %v2193 = vpop.permute.xlu0 %2192
  %2196 = vset.pattern.permute.xlu0 0
  %2197 = vperm.xlu0 %2196, %v2176
  %v2198 = vpop.permute.xlu0 %2197
  %2201 = vset.pattern.permute.xlu0 0
  %2202 = vperm.xlu0 %2201, %v2177
  %v2203 = vpop.permute.xlu0 %2202
  %2206 = vset.pattern.permute.xlu0 0
  %2207 = vperm.xlu0 %2206, %v2178
  %v2208 = vpop.permute.xlu0 %2207
  %2211 = vset.pattern.permute.xlu0 0
  %2212 = vperm.xlu0 %2211, %v2179
  %v2213 = vpop.permute.xlu0 %2212
  %2216 = vset.pattern.permute.xlu0 0
  %2217 = vperm.xlu0 %2216, %v2180
  %v2218 = vpop.permute.xlu0 %2217
  %2221 = vset.pattern.permute.xlu0 0
  %2222 = vperm.xlu0 %2221, %v2181
  %v2223 = vpop.permute.xlu0 %2222
  %2226 = vset.pattern.permute.xlu0 0
  %2227 = vperm.xlu0 %2226, %v2182
  %v2228 = vpop.permute.xlu0 %2227
  %2231 = vset.pattern.permute.xlu0 0
  %2232 = vperm.xlu0 %2231, %v2183
  %v2233 = vpop.permute.xlu0 %2232
  %2236 = vset.pattern.permute.xlu0 0
  %2237 = vperm.xlu0 %2236, %v2184
  %v2238 = vpop.permute.xlu0 %2237
  %2241 = vset.pattern.permute.xlu0 0
  %2242 = vperm.xlu0 %2241, %v2185
  %v2243 = vpop.permute.xlu0 %2242
  %2246 = vset.pattern.permute.xlu0 0
  %2247 = vperm.xlu0 %2246, %v2186
  %v2248 = vpop.permute.xlu0 %2247
  %2251 = vset.pattern.permute.xlu0 0
  %2252 = vperm.xlu0 %2251, %v2187
  %v2253 = vpop.permute.xlu0 %2252
  %2256 = vset.pattern.permute.xlu0 0
  %2257 = vperm.xlu0 %2256, %v2188
  %v2258 = vpop.permute.xlu0 %2257
  %2261 = vset.pattern.permute.xlu0 0
  %2262 = vperm.xlu0 %2261, %v2189
  %v2263 = vpop.permute.xlu0 %2262
  %v2295 = vunpack.c.l.b16 %v2145
  %v2296 = vunpack.c.h.b16 %v2145
  %v2297 = vunpack.c.l.b16 %v2146
  %v2298 = vunpack.c.h.b16 %v2146
  %v2299 = vunpack.c.l.b16 %v2147
  %v2300 = vunpack.c.h.b16 %v2147
  %v2301 = vunpack.c.l.b16 %v2148
  %v2302 = vunpack.c.h.b16 %v2148
  %v2303 = vunpack.c.l.b16 %v2149
  %v2304 = vunpack.c.h.b16 %v2149
  %v2305 = vunpack.c.l.b16 %v2150
  %v2306 = vunpack.c.h.b16 %v2150
  %v2307 = vunpack.c.l.b16 %v2151
  %v2308 = vunpack.c.h.b16 %v2151
  %v2309 = vunpack.c.l.b16 %v2152
  %v2310 = vunpack.c.h.b16 %v2152
  %v2311 = vunpack.c.l.b16 %v2153
  %v2312 = vunpack.c.h.b16 %v2153
  %v2313 = vunpack.c.l.b16 %v2154
  %v2314 = vunpack.c.h.b16 %v2154
  %v2315 = vunpack.c.l.b16 %v2155
  %v2316 = vunpack.c.h.b16 %v2155
  %v2317 = vunpack.c.l.b16 %v2156
  %v2318 = vunpack.c.h.b16 %v2156
  %v2319 = vunpack.c.l.b16 %v2157
  %v2320 = vunpack.c.h.b16 %v2157
  %v2321 = vunpack.c.l.b16 %v2158
  %v2322 = vunpack.c.h.b16 %v2158
  %v2323 = vunpack.c.l.b16 %v2159
  %v2324 = vunpack.c.h.b16 %v2159
  %v2325 = vunpack.c.l.b16 %v2160
  %v2326 = vunpack.c.h.b16 %v2160
  %v2327 = vunpack.c.l.b16 %v2161
  %v2328 = vunpack.c.h.b16 %v2161
  %v2329 = vunpack.c.l.b16 %v2162
  %v2330 = vunpack.c.h.b16 %v2162
  %v2331 = vunpack.c.l.b16 %v2163
  %v2332 = vunpack.c.h.b16 %v2163
  %v2333 = vunpack.c.l.b16 %v2164
  %v2334 = vunpack.c.h.b16 %v2164
  %v2335 = vunpack.c.l.b16 %v2165
  %v2336 = vunpack.c.h.b16 %v2165
  %v2337 = vunpack.c.l.b16 %v2166
  %v2338 = vunpack.c.h.b16 %v2166
  %v2339 = vunpack.c.l.b16 %v2167
  %v2340 = vunpack.c.h.b16 %v2167
  %v2341 = vunpack.c.l.b16 %v2168
  %v2342 = vunpack.c.h.b16 %v2168
  %v2343 = vunpack.c.l.b16 %v2169
  %v2344 = vunpack.c.h.b16 %v2169
  %v2345 = vunpack.c.l.b16 %v2170
  %v2346 = vunpack.c.h.b16 %v2170
  %v2347 = vunpack.c.l.b16 %v2171
  %v2348 = vunpack.c.h.b16 %v2171
  %v2349 = vunpack.c.l.b16 %v2172
  %v2350 = vunpack.c.h.b16 %v2172
  %v2351 = vunpack.c.l.b16 %v2173
  %v2352 = vunpack.c.h.b16 %v2173
  %v2353 = vunpack.c.l.b16 %v2174
  %v2354 = vunpack.c.h.b16 %v2174
  %v2355 = vpack.c.b16 %v2299, %v2295
  %v2356 = vpack.c.b16 %v2300, %v2296
  %v2357 = vpack.c.b16 %v2301, %v2297
  %v2358 = vpack.c.b16 %v2302, %v2298
  %v2359 = vpack.c.b16 %v2307, %v2303
  %v2360 = vpack.c.b16 %v2308, %v2304
  %v2361 = vpack.c.b16 %v2309, %v2305
  %v2362 = vpack.c.b16 %v2310, %v2306
  %v2363 = vpack.c.b16 %v2315, %v2311
  %v2364 = vpack.c.b16 %v2316, %v2312
  %v2365 = vpack.c.b16 %v2317, %v2313
  %v2366 = vpack.c.b16 %v2318, %v2314
  %v2367 = vpack.c.b16 %v2323, %v2319
  %v2368 = vpack.c.b16 %v2324, %v2320
  %v2369 = vpack.c.b16 %v2325, %v2321
  %v2370 = vpack.c.b16 %v2326, %v2322
  %v2371 = vpack.c.b16 %v2331, %v2327
  %v2372 = vpack.c.b16 %v2332, %v2328
  %v2373 = vpack.c.b16 %v2333, %v2329
  %v2374 = vpack.c.b16 %v2334, %v2330
  %v2375 = vpack.c.b16 %v2339, %v2335
  %v2376 = vpack.c.b16 %v2340, %v2336
  %v2377 = vpack.c.b16 %v2341, %v2337
  %v2378 = vpack.c.b16 %v2342, %v2338
  %v2379 = vpack.c.b16 %v2347, %v2343
  %v2380 = vpack.c.b16 %v2348, %v2344
  %v2381 = vpack.c.b16 %v2349, %v2345
  %v2382 = vpack.c.b16 %v2350, %v2346
  %v2383 = vpack.c.b16 %v2351, %v2351
  %v2384 = vpack.c.b16 %v2352, %v2352
  %v2385 = vpack.c.b16 %v2353, %v2353
  %v2386 = vpack.c.b16 %v2354, %v2354
  %vm2411 = vcmask 130048
  %v2413 = vsel %vm2411, %v2358, 0
  %v2416 = vsel %vm2411, %v2362, 0
  %v2419 = vsel %vm2411, %v2366, 0
  %v2422 = vsel %vm2411, %v2370, 0
  %v2425 = vsel %vm2411, %v2374, 0
  %v2428 = vsel %vm2411, %v2378, 0
  %v2431 = vsel %vm2411, %v2382, 0
  %v2434 = vsel %vm2411, %v2386, 0
  %2436 = vmatpush.bf16.msra.mxu0 %v2057
  %2437 = vmatpush.bf16.msra.mxu0 %v2053
  %2438 = vmatpush.bf16.msra.mxu0 %v2047
  %2439 = vmatpush.bf16.msra.mxu0 %v2043
  %2440 = vmatpush.bf16.msra.mxu0 %v2037
  %2441 = vmatpush.bf16.msra.mxu0 %v2033
  %2442 = vmatpush.bf16.msra.mxu0 %v2027
  %2443 = vmatpush.bf16.msra.mxu0 %v2023
  %2444 = vmatmul.bf16.gmra.mxu0 %v2355
  %v2445 = vpop.f32.mrf.mxu0
  %v2446 = vadd.f32 %v2193, %v2445
  %v2447 = vpop.f32.mrf.mxu0
  %v2448 = vadd.f32 %v2198, %v2447
  %2449 = vmatmul.bf16.gmra.mxu0 %v2359
  %v2450 = vpop.f32.mrf.mxu0
  %v2451 = vadd.f32 %v2203, %v2450
  %v2452 = vpop.f32.mrf.mxu0
  %v2453 = vadd.f32 %v2208, %v2452
  %2454 = vmatmul.bf16.gmra.mxu0 %v2363
  %v2455 = vpop.f32.mrf.mxu0
  %v2456 = vadd.f32 %v2213, %v2455
  %v2457 = vpop.f32.mrf.mxu0
  %v2458 = vadd.f32 %v2218, %v2457
  %2459 = vmatmul.bf16.gmra.mxu0 %v2367
  %v2460 = vpop.f32.mrf.mxu0
  %v2461 = vadd.f32 %v2223, %v2460
  %v2462 = vpop.f32.mrf.mxu0
  %v2463 = vadd.f32 %v2228, %v2462
  %2464 = vmatmul.bf16.gmra.mxu0 %v2371
  %v2465 = vpop.f32.mrf.mxu0
  %v2466 = vadd.f32 %v2233, %v2465
  %v2467 = vpop.f32.mrf.mxu0
  %v2468 = vadd.f32 %v2238, %v2467
  %2469 = vmatmul.bf16.gmra.mxu0 %v2375
  %v2470 = vpop.f32.mrf.mxu0
  %v2471 = vadd.f32 %v2243, %v2470
  %v2472 = vpop.f32.mrf.mxu0
  %v2473 = vadd.f32 %v2248, %v2472
  %2474 = vmatmul.bf16.gmra.mxu0 %v2379
  %v2475 = vpop.f32.mrf.mxu0
  %v2476 = vadd.f32 %v2253, %v2475
  %v2477 = vpop.f32.mrf.mxu0
  %v2478 = vadd.f32 %v2258, %v2477
  %2479 = vmatmul.bf16.gmra.mxu0 %v2383
  %v2480 = vpop.f32.mrf.mxu0
  %v2481 = vadd.f32 %v2263, %v2480
  %v2482 = vpop.f32.mrf.mxu0
  %2483 = vdwg.mxu0
  %2484 = vmatpush.bf16.msra.mxu0 %v2097
  %2485 = vmatpush.bf16.msra.mxu0 %v2093
  %2486 = vmatpush.bf16.msra.mxu0 %v2087
  %2487 = vmatpush.bf16.msra.mxu0 %v2083
  %2488 = vmatpush.bf16.msra.mxu0 %v2077
  %2489 = vmatpush.bf16.msra.mxu0 %v2073
  %2490 = vmatpush.bf16.msra.mxu0 %v2067
  %2491 = vmatpush.bf16.msra.mxu0 %v2063
  %2492 = vmatmul.bf16.gmra.mxu0 %v2356
  %v2493 = vpop.f32.mrf.mxu0
  %v2494 = vadd.f32 %v2446, %v2493
  %v2495 = vpop.f32.mrf.mxu0
  %v2496 = vadd.f32 %v2448, %v2495
  %2497 = vmatmul.bf16.gmra.mxu0 %v2360
  %v2498 = vpop.f32.mrf.mxu0
  %v2499 = vadd.f32 %v2451, %v2498
  %v2500 = vpop.f32.mrf.mxu0
  %v2501 = vadd.f32 %v2453, %v2500
  %2502 = vmatmul.bf16.gmra.mxu0 %v2364
  %v2503 = vpop.f32.mrf.mxu0
  %v2504 = vadd.f32 %v2456, %v2503
  %v2505 = vpop.f32.mrf.mxu0
  %v2506 = vadd.f32 %v2458, %v2505
  %2507 = vmatmul.bf16.gmra.mxu0 %v2368
  %v2508 = vpop.f32.mrf.mxu0
  %v2509 = vadd.f32 %v2461, %v2508
  %v2510 = vpop.f32.mrf.mxu0
  %v2511 = vadd.f32 %v2463, %v2510
  %2512 = vmatmul.bf16.gmra.mxu0 %v2372
  %v2513 = vpop.f32.mrf.mxu0
  %v2514 = vadd.f32 %v2466, %v2513
  %v2515 = vpop.f32.mrf.mxu0
  %v2516 = vadd.f32 %v2468, %v2515
  %2517 = vmatmul.bf16.gmra.mxu0 %v2376
  %v2518 = vpop.f32.mrf.mxu0
  %v2519 = vadd.f32 %v2471, %v2518
  %v2520 = vpop.f32.mrf.mxu0
  %v2521 = vadd.f32 %v2473, %v2520
  %2522 = vmatmul.bf16.gmra.mxu0 %v2380
  %v2523 = vpop.f32.mrf.mxu0
  %v2524 = vadd.f32 %v2476, %v2523
  %v2525 = vpop.f32.mrf.mxu0
  %v2526 = vadd.f32 %v2478, %v2525
  %2527 = vmatmul.bf16.gmra.mxu0 %v2384
  %v2528 = vpop.f32.mrf.mxu0
  %v2529 = vadd.f32 %v2481, %v2528
  %v2530 = vpop.f32.mrf.mxu0
  %2531 = vdwg.mxu0
  %2532 = vmatpush.bf16.msra.mxu0 %v2137
  %2533 = vmatpush.bf16.msra.mxu0 %v2133
  %2534 = vmatpush.bf16.msra.mxu0 %v2127
  %2535 = vmatpush.bf16.msra.mxu0 %v2123
  %2536 = vmatpush.bf16.msra.mxu0 %v2117
  %2537 = vmatpush.bf16.msra.mxu0 %v2113
  %2538 = vmatpush.bf16.msra.mxu0 %v2107
  %2539 = vmatpush.bf16.msra.mxu0 %v2103
  %2540 = vmatmul.bf16.gmra.mxu0 %v2357
  %v2541 = vpop.f32.mrf.mxu0
  %v2542 = vadd.f32 %v2494, %v2541
  %v2543 = vpop.f32.mrf.mxu0
  %v2544 = vadd.f32 %v2496, %v2543
  %2545 = vmatmul.bf16.gmra.mxu0 %v2361
  %v2546 = vpop.f32.mrf.mxu0
  %v2547 = vadd.f32 %v2499, %v2546
  %v2548 = vpop.f32.mrf.mxu0
  %v2549 = vadd.f32 %v2501, %v2548
  %2550 = vmatmul.bf16.gmra.mxu0 %v2365
  %v2551 = vpop.f32.mrf.mxu0
  %v2552 = vadd.f32 %v2504, %v2551
  %v2553 = vpop.f32.mrf.mxu0
  %v2554 = vadd.f32 %v2506, %v2553
  %2555 = vmatmul.bf16.gmra.mxu0 %v2369
  %v2556 = vpop.f32.mrf.mxu0
  %v2557 = vadd.f32 %v2509, %v2556
  %v2558 = vpop.f32.mrf.mxu0
  %v2559 = vadd.f32 %v2511, %v2558
  %2560 = vmatmul.bf16.gmra.mxu0 %v2373
  %v2561 = vpop.f32.mrf.mxu0
  %v2562 = vadd.f32 %v2514, %v2561
  %v2563 = vpop.f32.mrf.mxu0
  %v2564 = vadd.f32 %v2516, %v2563
  %2565 = vmatmul.bf16.gmra.mxu0 %v2377
  %v2566 = vpop.f32.mrf.mxu0
  %v2567 = vadd.f32 %v2519, %v2566
  %v2568 = vpop.f32.mrf.mxu0
  %v2569 = vadd.f32 %v2521, %v2568
  %2570 = vmatmul.bf16.gmra.mxu0 %v2381
  %v2571 = vpop.f32.mrf.mxu0
  %v2572 = vadd.f32 %v2524, %v2571
  %v2573 = vpop.f32.mrf.mxu0
  %v2574 = vadd.f32 %v2526, %v2573
  %2575 = vmatmul.bf16.gmra.mxu0 %v2385
  %v2576 = vpop.f32.mrf.mxu0
  %v2577 = vadd.f32 %v2529, %v2576
  %v2578 = vpop.f32.mrf.mxu0
  %2579 = vdwg.mxu0
  %2580 = vmatpush.bf16.msra.mxu0 0
  %2581 = vmatpush.bf16.msra.mxu0 0
  %2582 = vmatpush.bf16.msra.mxu0 0
  %2583 = vmatpush.bf16.msra.mxu0 0
  %2584 = vmatpush.bf16.msra.mxu0 0
  %2585 = vmatpush.bf16.msra.mxu0 0
  %2586 = vmatpush.bf16.msra.mxu0 0
  %2587 = vmatpush.bf16.msra.mxu0 %v2143
  %2588 = vmatmul.bf16.gmra.mxu0 %v2413
  %v2589 = vpop.f32.mrf.mxu0
  %v2590 = vadd.f32 %v2542, %v2589
  %v2591 = vpop.f32.mrf.mxu0
  %v2592 = vadd.f32 %v2544, %v2591
  %2593 = vmatmul.bf16.gmra.mxu0 %v2416
  %v2594 = vpop.f32.mrf.mxu0
  %v2595 = vadd.f32 %v2547, %v2594
  %v2596 = vpop.f32.mrf.mxu0
  %v2597 = vadd.f32 %v2549, %v2596
  %2598 = vmatmul.bf16.gmra.mxu0 %v2419
  %v2599 = vpop.f32.mrf.mxu0
  %v2600 = vadd.f32 %v2552, %v2599
  %v2601 = vpop.f32.mrf.mxu0
  %v2602 = vadd.f32 %v2554, %v2601
  %2603 = vmatmul.bf16.gmra.mxu0 %v2422
  %v2604 = vpop.f32.mrf.mxu0
  %v2605 = vadd.f32 %v2557, %v2604
  %v2606 = vpop.f32.mrf.mxu0
  %v2607 = vadd.f32 %v2559, %v2606
  %2608 = vmatmul.bf16.gmra.mxu0 %v2425
  %v2609 = vpop.f32.mrf.mxu0
  %v2610 = vadd.f32 %v2562, %v2609
  %v2611 = vpop.f32.mrf.mxu0
  %v2612 = vadd.f32 %v2564, %v2611
  %2613 = vmatmul.bf16.gmra.mxu0 %v2428
  %v2614 = vpop.f32.mrf.mxu0
  %v2615 = vadd.f32 %v2567, %v2614
  %v2616 = vpop.f32.mrf.mxu0
  %v2617 = vadd.f32 %v2569, %v2616
  %2618 = vmatmul.bf16.gmra.mxu0 %v2431
  %v2619 = vpop.f32.mrf.mxu0
  %v2620 = vadd.f32 %v2572, %v2619
  %v2621 = vpop.f32.mrf.mxu0
  %v2622 = vadd.f32 %v2574, %v2621
  %2623 = vmatmul.bf16.gmra.mxu0 %v2434
  %v2624 = vpop.f32.mrf.mxu0
  %v2625 = vadd.f32 %v2577, %v2624
  %v2626 = vpop.f32.mrf.mxu0
  %2627 = vdwg.mxu0
  %v2628 = vmax.f32 %v2590, 0.0
  %v2629 = vmax.f32 %v2592, 0.0
  %v2630 = vmax.f32 %v2595, 0.0
  %v2631 = vmax.f32 %v2597, 0.0
  %v2632 = vmax.f32 %v2600, 0.0
  %v2633 = vmax.f32 %v2602, 0.0
  %v2634 = vmax.f32 %v2605, 0.0
  %v2635 = vmax.f32 %v2607, 0.0
  %v2636 = vmax.f32 %v2610, 0.0
  %v2637 = vmax.f32 %v2612, 0.0
  %v2638 = vmax.f32 %v2615, 0.0
  %v2639 = vmax.f32 %v2617, 0.0
  %v2640 = vmax.f32 %v2620, 0.0
  %v2641 = vmax.f32 %v2622, 0.0
  %v2642 = vmax.f32 %v2625, 0.0
  %v2643 = vld [vmem:[%s6] sm:$0xf]
  %v2644 = vld [vmem:[%s6 + $0x4] sm:$0xf]
  %v2645 = vld [vmem:[%s6 + $0x8] sm:$0xf]
  %v2646 = vld [vmem:[%s6 + $0xc] sm:$0xf]
  %v2647 = vld [vmem:[%s6 + $0x10] sm:$0xf]
  %v2648 = vld [vmem:[%s6 + $0x14] sm:$0xf]
  %v2649 = vld [vmem:[%s6 + $0x18] sm:$0xf]
  %v2650 = vld [vmem:[%s6 + $0x1c] sm:$0xf]
  %v2651 = vld [vmem:[%s6 + $0x20] sm:$0xf]
  %v2652 = vld [vmem:[%s6 + $0x24] sm:$0xf]
  %v2653 = vld [vmem:[%s6 + $0x28] sm:$0x3]
  %v2654 = vpack.c.bf16 %v2629, %v2628
  %v2655 = vpack.c.bf16 %v2631, %v2630
  %v2656 = vpack.c.bf16 %v2633, %v2632
  %v2657 = vpack.c.bf16 %v2635, %v2634
  %v2658 = vpack.c.bf16 %v2637, %v2636
  %v2659 = vpack.c.bf16 %v2639, %v2638
  %v2660 = vpack.c.bf16 %v2641, %v2640
  %v2661 = vpack.c.bf16 %v2642, %v2642
  %v2662 = vld [vmem:[%s7] sm:$0xff]
  %v2663 = vld [vmem:[%s7 + $0x8] sm:$0xff]
  %v2664 = vld [vmem:[%s7 + $0x10] sm:$0xff]
  %v2665 = vld [vmem:[%s7 + $0x18] sm:$0xff]
  %v2666 = vld [vmem:[%s7 + $0x20] sm:$0xff]
  %v2667 = vld [vmem:[%s7 + $0x28] sm:$0xff]
  %v2668 = vld [vmem:[%s7 + $0x30] sm:$0xff]
  %v2669 = vld [vmem:[%s7 + $0x38] sm:$0xff]
  %v2670 = vld [vmem:[%s7 + $0x40] sm:$0xff]
  %v2671 = vld [vmem:[%s7 + $0x48] sm:$0xff]
  %v2672 = vld [vmem:[%s7 + $0x50] sm:$0xf]
  %2674 = vset.pattern.permute.xlu0 0
  %2675 = vperm.xlu0 %2674, %v2662
  %v2676 = vpop.permute.xlu0 %2675
  %2679 = vset.pattern.permute.xlu0 0
  %2680 = vperm.xlu0 %2679, %v2663
  %v2681 = vpop.permute.xlu0 %2680
  %2684 = vset.pattern.permute.xlu0 0
  %2685 = vperm.xlu0 %2684, %v2664
  %v2686 = vpop.permute.xlu0 %2685
  %2689 = vset.pattern.permute.xlu0 0
  %2690 = vperm.xlu0 %2689, %v2665
  %v2691 = vpop.permute.xlu0 %2690
  %2694 = vset.pattern.permute.xlu0 0
  %2695 = vperm.xlu0 %2694, %v2666
  %v2696 = vpop.permute.xlu0 %2695
  %2699 = vset.pattern.permute.xlu0 0
  %2700 = vperm.xlu0 %2699, %v2667
  %v2701 = vpop.permute.xlu0 %2700
  %2704 = vset.pattern.permute.xlu0 0
  %2705 = vperm.xlu0 %2704, %v2668
  %v2706 = vpop.permute.xlu0 %2705
  %2709 = vset.pattern.permute.xlu0 0
  %2710 = vperm.xlu0 %2709, %v2669
  %v2711 = vpop.permute.xlu0 %2710
  %2714 = vset.pattern.permute.xlu0 0
  %2715 = vperm.xlu0 %2714, %v2670
  %v2716 = vpop.permute.xlu0 %2715
  %2719 = vset.pattern.permute.xlu0 0
  %2720 = vperm.xlu0 %2719, %v2671
  %v2721 = vpop.permute.xlu0 %2720
  %2724 = vset.pattern.permute.xlu0 0
  %2725 = vperm.xlu0 %2724, %v2672
  %v2726 = vpop.permute.xlu0 %2725
  %v2739 = vunpack.c.l.b16 %v2643
  %v2740 = vunpack.c.l.b16 %v2644
  %v2741 = vunpack.c.l.b16 %v2645
  %v2742 = vunpack.c.l.b16 %v2646
  %v2743 = vunpack.c.l.b16 %v2647
  %v2744 = vunpack.c.l.b16 %v2648
  %v2745 = vunpack.c.l.b16 %v2649
  %v2746 = vunpack.c.l.b16 %v2650
  %v2747 = vunpack.c.l.b16 %v2651
  %v2748 = vunpack.c.l.b16 %v2652
  %v2749 = vunpack.c.l.b16 %v2653
  %v2750 = vpack.c.b16 %v2740, %v2739
  %v2751 = vpack.c.b16 %v2742, %v2741
  %v2752 = vpack.c.b16 %v2744, %v2743
  %v2753 = vpack.c.b16 %v2746, %v2745
  %v2754 = vpack.c.b16 %v2748, %v2747
  %v2755 = vpack.c.b16 %v2749, %v2749
  %vm2756 = vcmask 982016
  %v2758 = vsel %vm2756, %v2750, 0
  %v2761 = vsel %vm2756, %v2751, 0
  %v2764 = vsel %vm2756, %v2752, 0
  %v2767 = vsel %vm2756, %v2753, 0
  %v2770 = vsel %vm2756, %v2754, 0
  %v2773 = vsel %vm2756, %v2755, 0
  %vm2775 = vcmask 1043456
  %v2777 = vsel %vm2775, %v2661, 0
  %2779 = vmatpush.bf16.msra.mxu0 %v2777
  %2780 = vmatpush.bf16.msra.mxu0 %v2660
  %2781 = vmatpush.bf16.msra.mxu0 %v2659
  %2782 = vmatpush.bf16.msra.mxu0 %v2658
  %2783 = vmatpush.bf16.msra.mxu0 %v2657
  %2784 = vmatpush.bf16.msra.mxu0 %v2656
  %2785 = vmatpush.bf16.msra.mxu0 %v2655
  %2786 = vmatpush.bf16.msra.mxu0 %v2654
  %2787 = vmatmul.bf16.gmra.mxu0 %v2758
  %v2788 = vpop.f32.mrf.mxu0
  %v2789 = vadd.f32 %v2676, %v2788
  %v2790 = vpop.f32.mrf.mxu0
  %v2791 = vadd.f32 %v2681, %v2790
  %2792 = vmatmul.bf16.gmra.mxu0 %v2761
  %v2793 = vpop.f32.mrf.mxu0
  %v2794 = vadd.f32 %v2686, %v2793
  %v2795 = vpop.f32.mrf.mxu0
  %v2796 = vadd.f32 %v2691, %v2795
  %2797 = vmatmul.bf16.gmra.mxu0 %v2764
  %v2798 = vpop.f32.mrf.mxu0
  %v2799 = vadd.f32 %v2696, %v2798
  %v2800 = vpop.f32.mrf.mxu0
  %v2801 = vadd.f32 %v2701, %v2800
  %2802 = vmatmul.bf16.gmra.mxu0 %v2767
  %v2803 = vpop.f32.mrf.mxu0
  %v2804 = vadd.f32 %v2706, %v2803
  %v2805 = vpop.f32.mrf.mxu0
  %v2806 = vadd.f32 %v2711, %v2805
  %2807 = vmatmul.bf16.gmra.mxu0 %v2770
  %v2808 = vpop.f32.mrf.mxu0
  %v2809 = vadd.f32 %v2716, %v2808
  %v2810 = vpop.f32.mrf.mxu0
  %v2811 = vadd.f32 %v2721, %v2810
  %2812 = vmatmul.bf16.gmra.mxu0 %v2773
  %v2813 = vpop.f32.mrf.mxu0
  %v2814 = vadd.f32 %v2726, %v2813
  %v2815 = vpop.f32.mrf.mxu0
  %2816 = vdwg.mxu0
  %v2817 = vmax.f32 %v2789, 0.0
  %v2818 = vmax.f32 %v2791, 0.0
  %v2819 = vmax.f32 %v2794, 0.0
  %v2820 = vmax.f32 %v2796, 0.0
  %v2821 = vmax.f32 %v2799, 0.0
  %v2822 = vmax.f32 %v2801, 0.0
  %v2823 = vmax.f32 %v2804, 0.0
  %v2824 = vmax.f32 %v2806, 0.0
  %v2825 = vmax.f32 %v2809, 0.0
  %v2826 = vmax.f32 %v2811, 0.0
  %v2827 = vmax.f32 %v2814, 0.0
  %v2828 = vld [vmem:[%s8] sm:$0x3]
  %v2829 = vpack.c.bf16 %v2818, %v2817
  %v2830 = vpack.c.bf16 %v2820, %v2819
  %v2831 = vpack.c.bf16 %v2822, %v2821
  %v2832 = vpack.c.bf16 %v2824, %v2823
  %v2833 = vpack.c.bf16 %v2826, %v2825
  %v2834 = vpack.c.bf16 %v2827, %v2827
  %v2835 = vld [vmem:[%s9] sm:$0x7]
  %2837 = vset.pattern.permute.xlu0 0
  %2838 = vperm.xlu0 %2837, %v2835
  %v2839 = vpop.permute.xlu0 %2838
  %vm2841 = vcmask 687104
  %v2843 = vsel %vm2841, %v2828, 0
  %vm2845 = vcmask 1041408
  %v2847 = vsel %vm2845, %v2834, 0
  %2849 = vmatpush.bf16.msra.mxu0 0
  %2850 = vmatpush.bf16.msra.mxu0 0
  %2851 = vmatpush.bf16.msra.mxu0 %v2847
  %2852 = vmatpush.bf16.msra.mxu0 %v2833
  %2853 = vmatpush.bf16.msra.mxu0 %v2832
  %2854 = vmatpush.bf16.msra.mxu0 %v2831
  %2855 = vmatpush.bf16.msra.mxu0 %v2830
  %2856 = vmatpush.bf16.msra.mxu0 %v2829
  %2857 = vmatmul.bf16.gmra.mxu0 %v2843
  %v2858 = vpop.f32.mrf.mxu0
  %v2859 = vadd.f32 %v2839, %v2858
  %v2860 = vpop.f32.mrf.mxu0
  %2861 = vdwg.mxu0
  %2862 = vst [vmem:[%s10] sm:$0x7] %v2859
  // Predicated region
  $region42: #{lenet_forward.3} parent=0 // pred_check
    _
  $region43: #{lenet_forward.3} parent=0 // pred_check_branch
    %2864 = sbr.rel (0) target = $region45
  $region44: #{lenet_forward.3} parent=0 // pred_region
    _
  $region45: #{lenet_forward.3} parent=0 // pred_fallthru
    _
  // Predicated region
  $region46: #{lenet_forward.3} parent=0 // pred_check
    _
  $region47: #{lenet_forward.3} parent=0 // pred_check_branch
    %2866 = sbr.rel (0) target = $region49
  $region48: #{lenet_forward.3} parent=0 // pred_region
    _
  $region49: #{lenet_forward.3} parent=0 // pred_fallthru
    _

</llo_original>
